<compile_context>
chip_gen: v7x
topology: tpu7x:2x2x1
jax: 0.10.0
libtpu: 0.0.40
codegen_flags: <defaults>
</compile_context>

<pallas_src>
import functools

import jax
import jax.numpy as jnp
from jax.experimental import pallas as pl
from jax.experimental.pallas import tpu as pltpu


def _round_up(x, m):
    return (x + m - 1) // m * m


def _bond_encoder_kernel(attr_ref, table_ref, out_ref, *, offsets):
    # attr_ref : [TE, F]  int32   edge-major tile of edge_attr
    # table_ref: [TD, D]  float32 concatenated per-feature tables (resident)
    # out_ref  : [TE, D]          edge-major output tile (stored once; no extra pass)
    td = table_ref.shape[0]
    te = attr_ref.shape[0]

    # Lane iota over global table rows, materialized once per grid step and
    # reused by every compare (JAX does not CSE broadcast_in_dim).
    rows = jax.lax.broadcasted_iota(jnp.int32, (te, td), 1)        # [TE, TD]

    # Multi-hot via boolean ORs (per-feature row ranges are disjoint) and a
    # single cast at the end -- exact 0/1 matrix, one MXU push total.
    hit = None
    for f, off in enumerate(offsets):                              # F tiny & static -> unrolled
        idx = attr_ref[:, pl.ds(f, 1)] + off                       # [TE, 1] global row id
        eq = rows == idx                                           # [TE, TD] bool
        hit = eq if hit is None else hit | eq
    mh = hit.astype(jnp.float32)                                   # [TE, TD] 0/1

    # One matmul per tile: [TE, TD] @ [TD, D] -> [TE, D], already edge-major.
    out_ref[...] = jnp.dot(
        mh, table_ref[...], preferred_element_type=jnp.float32
    ).astype(out_ref.dtype)


def bond_encoder_pallas(edge_attr, table, offsets, *, tile_edges=4096,
                        out_dtype=jnp.float32):
    """BondEncoder.forward as a single Pallas pass.

    edge_attr: [E, F] int32; table: [TD, D] f32 (concatenation of the per-feature
    embedding tables, rows padded to a multiple of 8); offsets: per-feature row
    offsets into `table`.  Returns [E, D] in `out_dtype`.
    """
    E, F = edge_attr.shape
    TD, D = table.shape
    if E == 0:
        return jnp.zeros((0, D), out_dtype)

    # Big tiles amortize per-grid-step overhead; cap at ~half the workload
    # (rounded to 512) so v7x's two TensorCores both get work.  Sweepable.
    tile = max(512, min(int(tile_edges), _round_up(-(-E // 2), 512)))
    E_pad = _round_up(E, tile)

    # TODO(synk): for v5e, attr could be shipped int8 / bit-packed to shrink the
    # (already minor) input DMA; kept int32 here for simplicity.
    attr = edge_attr.astype(jnp.int32)
    if E_pad != E:
        attr = jnp.pad(attr, ((0, E_pad - E), (0, 0)))   # padded rows sliced off below

    kernel = functools.partial(
        _bond_encoder_kernel, offsets=tuple(int(o) for o in offsets)
    )

    out = pl.pallas_call(
        kernel,
        out_shape=jax.ShapeDtypeStruct((E_pad, D), out_dtype),
        grid_spec=pltpu.PrefetchScalarGridSpec(
            num_scalar_prefetch=0,
            grid=(E_pad // tile,),
            in_specs=[
                pl.BlockSpec((tile, F), lambda i: (i, 0)),   # edge-attr tile (edge-major)
                pl.BlockSpec((TD, D), lambda i: (0, 0)),     # full table, resident
            ],
            out_specs=pl.BlockSpec((tile, D), lambda i: (i, 0)),
        ),
        compiler_params=pltpu.CompilerParams(
            dimension_semantics=("parallel",),
            # Explicit scoped-VMEM budget: covers caller-swept tiles up to ~8-16K
            # edges, stays below v7x's 64 MiB physical VMEM.
            vmem_limit_bytes=48 * 1024 * 1024,
        ),
    )(attr, table)

    return out[:E]


def make_bond_encoder_params(key, emb_dim, full_bond_feature_dims):
    """Xavier-uniform per-feature tables, concatenated into one [TD, D] table."""
    tables, offsets, off = [], [], 0
    for i, dim in enumerate(full_bond_feature_dims):
        k = jax.random.fold_in(key, i)
        a = (6.0 / (dim + emb_dim)) ** 0.5               # xavier_uniform bound
        tables.append(jax.random.uniform(k, (dim, emb_dim), jnp.float32,
                                         minval=-a, maxval=a))
        offsets.append(off)
        off += dim
    table = jnp.concatenate(tables, axis=0)               # [TD_raw, D]
    total = table.shape[0]
    total_pad = _round_up(total, 8)                       # sublane-friendly; padded rows never hit
    if total_pad != total:
        table = jnp.pad(table, ((0, total_pad - total), (0, 0)))
    return table, tuple(offsets)                          # [TD, D]


def bond_encoder_ref(edge_attr, table, offsets):
    """Plain-JAX reference of BondEncoder.forward."""
    out = 0
    for f, off in enumerate(offsets):
        out = out + jnp.take(table, edge_attr[:, f] + off, axis=0)
    return out


if __name__ == "__main__":
    key = jax.random.PRNGKey(0)

    emb_dim = 32
    full_bond_feature_dims = [5, 6, 2]   # small synthetic bond-feature vocab sizes
    num_edges = 64                       # E (wrapper pads internally to the tile)

    table, offsets = make_bond_encoder_params(key, emb_dim, full_bond_feature_dims)

    # Integer edge attributes, feature i in [0, dim_i)
    attr_cols = []
    for i, dim in enumerate(full_bond_feature_dims):
        k = jax.random.fold_in(key, 100 + i)
        attr_cols.append(jax.random.randint(k, (num_edges, 1), 0, dim, dtype=jnp.int32))
    edge_attr = jnp.concatenate(attr_cols, axis=1)        # [E, F] int32

    out = bond_encoder_pallas(edge_attr, table, offsets, tile_edges=4096)
    out = jax.block_until_ready(out)

    ref = bond_encoder_ref(edge_attr, table, offsets)
    assert out.shape == (num_edges, emb_dim)
    assert jnp.allclose(out, ref, atol=1e-5, rtol=1e-5), "mismatch vs reference"

    print("KERNEL_OK")
</pallas_src>

<mosaic_0001>
module attributes {stable_mosaic.version = 11 : i64} {
  func.func @_bond_encoder_kernel(%arg0: i32, %arg1: memref<512x3xi32, #tpu.memory_space<vmem>>, %arg2: memref<16x32xf32, #tpu.memory_space<vmem>>, %arg3: memref<512x32xf32, #tpu.memory_space<vmem>>) attributes {dimension_semantics = [#tpu.dimension_semantics<parallel>], iteration_bounds = array<i64: 1>, scalar_prefetch = 0 : i64, scratch_operands = 0 : i64, tpu.core_type = #tpu.core_type<tc>, window_params = [{transform_indices = @transform_0, window_bounds = array<i64: 512, 3>}, {pipeline_mode = #tpu.pipeline_mode<synchronous>, transform_indices = @transform_1, window_bounds = array<i64: 16, 32>}, {transform_indices = @transform_2, window_bounds = array<i64: 512, 32>}]} {
    %0 = tpu.iota {dimensions = array<i32: 1>} : vector<512x16xi32>
    %c0 = arith.constant 0 : index
    %c0_0 = arith.constant 0 : index
    %1 = vector.load %arg1[%c0, %c0_0] : memref<512x3xi32, #tpu.memory_space<vmem>>, vector<512x1xi32>
    %c0_i32 = arith.constant 0 : i32
    %2 = vector.broadcast %c0_i32 : i32 to vector<512x1xi32>
    %3 = arith.addi %1, %2 : vector<512x1xi32>
    %4 = vector.broadcast %3 : vector<512x1xi32> to vector<512x16xi32>
    %5 = arith.cmpi eq, %0, %4 : vector<512x16xi32>
    %c0_1 = arith.constant 0 : index
    %c1 = arith.constant 1 : index
    %6 = vector.load %arg1[%c0_1, %c1] : memref<512x3xi32, #tpu.memory_space<vmem>>, vector<512x1xi32>
    %c5_i32 = arith.constant 5 : i32
    %7 = vector.broadcast %c5_i32 : i32 to vector<512x1xi32>
    %8 = arith.addi %6, %7 : vector<512x1xi32>
    %9 = vector.broadcast %8 : vector<512x1xi32> to vector<512x16xi32>
    %10 = arith.cmpi eq, %0, %9 : vector<512x16xi32>
    %11 = arith.ori %5, %10 : vector<512x16xi1>
    %c0_2 = arith.constant 0 : index
    %c2 = arith.constant 2 : index
    %12 = vector.load %arg1[%c0_2, %c2] : memref<512x3xi32, #tpu.memory_space<vmem>>, vector<512x1xi32>
    %c11_i32 = arith.constant 11 : i32
    %13 = vector.broadcast %c11_i32 : i32 to vector<512x1xi32>
    %14 = arith.addi %12, %13 : vector<512x1xi32>
    %15 = vector.broadcast %14 : vector<512x1xi32> to vector<512x16xi32>
    %16 = arith.cmpi eq, %0, %15 : vector<512x16xi32>
    %17 = arith.ori %11, %16 : vector<512x16xi1>
    %18 = arith.extui %17 : vector<512x16xi1> to vector<512x16xi32>
    %19 = arith.sitofp %18 : vector<512x16xi32> to vector<512x16xf32>
    %c0_3 = arith.constant 0 : index
    %c0_4 = arith.constant 0 : index
    %20 = vector.load %arg2[%c0_3, %c0_4] : memref<16x32xf32, #tpu.memory_space<vmem>>, vector<16x32xf32>
    %cst = arith.constant dense<0.000000e+00> : vector<512x32xf32>
    %21 = tpu.matmul %19, %20, %cst {dimension_numbers = #tpu.dot_dimension_numbers<[1], [0], [0], [1], [0, 0, 1, 1], [], []>} : vector<512x16xf32>, vector<16x32xf32>, vector<512x32xf32> -> vector<512x32xf32>
    %c0_5 = arith.constant 0 : index
    %c0_6 = arith.constant 0 : index
    %22 = vector.load %arg3[%c0_5, %c0_6] : memref<512x32xf32, #tpu.memory_space<vmem>>, vector<512x32xf32>
    tpu.vector_store %arg3[%c0_5, %c0_6], %21 {strides = array<i32>} : memref<512x32xf32, #tpu.memory_space<vmem>>, vector<512x32xf32>,
    return
  }
  func.func @transform_0(%arg0: i32) -> (i32, i32) {
    %c0_i32 = arith.constant 0 : i32
    %c0_i32_0 = arith.constant 0 : i32
    return %arg0, %c0_i32 : i32, i32
  }
  func.func @transform_1(%arg0: i32) -> (i32, i32) {
    %c0_i32 = arith.constant 0 : i32
    %c0_i32_0 = arith.constant 0 : i32
    %c0_i32_1 = arith.constant 0 : i32
    return %c0_i32, %c0_i32_0 : i32, i32
  }
  func.func @transform_2(%arg0: i32) -> (i32, i32) {
    %c0_i32 = arith.constant 0 : i32
    %c0_i32_0 = arith.constant 0 : i32
    return %arg0, %c0_i32 : i32, i32
  }
}

</mosaic_0001>

<llo_original>
// kernel: tpu_custom_call.1
$region0: #{tpu_custom_call.1}
  #allocation0 [shape = 'u32[]', space=smem, size = 0x4, offset = 0x4, fixed_abs, tag = 'smem constant byte address 0x4 - core index']
  #allocation1 [shape = 'u32[144,128]{1,0:T(1,128)}', space=vmem, size = 0x12000, scoped, tag = 'internal scratch']
  %s0 = inlined_call_operand.vmem [shape: s32[512,3], index: 0, kind: input, shape index: {}]
  %s1 = inlined_call_operand.vmem [shape: f32[16,32], index: 1, kind: input, shape index: {}]
  %s2 = inlined_call_operand.vmem [shape: f32[512,32], index: 2, kind: output, shape index: {}]
  %s3 = sld [smem:[#allocation0]]
  $region18: #{tpu_custom_call.1} parent=0
    _
  %s5 = ssub.s32 1, %s3
  %s6 = scalar_select 0, %s5, %s3
  // Predicated region
  $region2: #{tpu_custom_call.1} parent=0 // pred_check
    _
  $region3: #{tpu_custom_call.1} parent=0 // pred_check_branch
    %8 = sbr.rel (0) target = $region5
  $region4: #{tpu_custom_call.1} parent=0 // pred_region
    _
  $region5: #{tpu_custom_call.1} parent=0 // pred_fallthru
    _
  // Predicated region
  $region6: #{tpu_custom_call.1} parent=0 // pred_check
    _
  $region7: #{tpu_custom_call.1} parent=0 // pred_check_branch
    %10 = sbr.rel (0) target = $region9
  $region8: #{tpu_custom_call.1} parent=0 // pred_region
    _
  $region9: #{tpu_custom_call.1} parent=0 // pred_fallthru
    _
  %v11 = vlaneseq
  %v12 = vand.u32 %v11, 127
  %v13 = vld [vmem:[%s0] sm:$0xff]
  %v14 = vld [vmem:[%s0 + $0x8] sm:$0xff]
  %v15 = vld [vmem:[%s0 + $0x10] sm:$0xff]
  %v16 = vld [vmem:[%s0 + $0x18] sm:$0xff]
  %v17 = vld [vmem:[%s0 + $0x20] sm:$0xff]
  %v18 = vld [vmem:[%s0 + $0x28] sm:$0xff]
  %v19 = vld [vmem:[%s0 + $0x30] sm:$0xff]
  %v20 = vld [vmem:[%s0 + $0x38] sm:$0xff]
  %v21 = vld [vmem:[%s0 + $0x40] sm:$0xff]
  %v22 = vld [vmem:[%s0 + $0x48] sm:$0xff]
  %v23 = vld [vmem:[%s0 + $0x50] sm:$0xff]
  %v24 = vld [vmem:[%s0 + $0x58] sm:$0xff]
  %v25 = vld [vmem:[%s0 + $0x60] sm:$0xff]
  %v26 = vld [vmem:[%s0 + $0x68] sm:$0xff]
  %v27 = vld [vmem:[%s0 + $0x70] sm:$0xff]
  %v28 = vld [vmem:[%s0 + $0x78] sm:$0xff]
  %v29 = vld [vmem:[%s0 + $0x80] sm:$0xff]
  %v30 = vld [vmem:[%s0 + $0x88] sm:$0xff]
  %v31 = vld [vmem:[%s0 + $0x90] sm:$0xff]
  %v32 = vld [vmem:[%s0 + $0x98] sm:$0xff]
  %v33 = vld [vmem:[%s0 + $0xa0] sm:$0xff]
  %v34 = vld [vmem:[%s0 + $0xa8] sm:$0xff]
  %v35 = vld [vmem:[%s0 + $0xb0] sm:$0xff]
  %v36 = vld [vmem:[%s0 + $0xb8] sm:$0xff]
  %v37 = vld [vmem:[%s0 + $0xc0] sm:$0xff]
  %v38 = vld [vmem:[%s0 + $0xc8] sm:$0xff]
  %v39 = vld [vmem:[%s0 + $0xd0] sm:$0xff]
  %v40 = vld [vmem:[%s0 + $0xd8] sm:$0xff]
  %v41 = vld [vmem:[%s0 + $0xe0] sm:$0xff]
  %v42 = vld [vmem:[%s0 + $0xe8] sm:$0xff]
  %v43 = vld [vmem:[%s0 + $0xf0] sm:$0xff]
  %v44 = vld [vmem:[%s0 + $0xf8] sm:$0xff]
  %v45 = vld [vmem:[%s0 + $0x100] sm:$0xff]
  %v46 = vld [vmem:[%s0 + $0x108] sm:$0xff]
  %v47 = vld [vmem:[%s0 + $0x110] sm:$0xff]
  %v48 = vld [vmem:[%s0 + $0x118] sm:$0xff]
  %v49 = vld [vmem:[%s0 + $0x120] sm:$0xff]
  %v50 = vld [vmem:[%s0 + $0x128] sm:$0xff]
  %v51 = vld [vmem:[%s0 + $0x130] sm:$0xff]
  %v52 = vld [vmem:[%s0 + $0x138] sm:$0xff]
  %v53 = vld [vmem:[%s0 + $0x140] sm:$0xff]
  %v54 = vld [vmem:[%s0 + $0x148] sm:$0xff]
  %v55 = vld [vmem:[%s0 + $0x150] sm:$0xff]
  %v56 = vld [vmem:[%s0 + $0x158] sm:$0xff]
  %v57 = vld [vmem:[%s0 + $0x160] sm:$0xff]
  %v58 = vld [vmem:[%s0 + $0x168] sm:$0xff]
  %v59 = vld [vmem:[%s0 + $0x170] sm:$0xff]
  %v60 = vld [vmem:[%s0 + $0x178] sm:$0xff]
  %v61 = vld [vmem:[%s0 + $0x180] sm:$0xff]
  %v62 = vld [vmem:[%s0 + $0x188] sm:$0xff]
  %v63 = vld [vmem:[%s0 + $0x190] sm:$0xff]
  %v64 = vld [vmem:[%s0 + $0x198] sm:$0xff]
  %v65 = vld [vmem:[%s0 + $0x1a0] sm:$0xff]
  %v66 = vld [vmem:[%s0 + $0x1a8] sm:$0xff]
  %v67 = vld [vmem:[%s0 + $0x1b0] sm:$0xff]
  %v68 = vld [vmem:[%s0 + $0x1b8] sm:$0xff]
  %v69 = vld [vmem:[%s0 + $0x1c0] sm:$0xff]
  %v70 = vld [vmem:[%s0 + $0x1c8] sm:$0xff]
  %v71 = vld [vmem:[%s0 + $0x1d0] sm:$0xff]
  %v72 = vld [vmem:[%s0 + $0x1d8] sm:$0xff]
  %v73 = vld [vmem:[%s0 + $0x1e0] sm:$0xff]
  %v74 = vld [vmem:[%s0 + $0x1e8] sm:$0xff]
  %v75 = vld [vmem:[%s0 + $0x1f0] sm:$0xff]
  %v76 = vld [vmem:[%s0 + $0x1f8] sm:$0xff]
  %77 = vset.pattern.permute.xlu0 0
  %78 = vperm.xlu0 %77, %v13
  %v79 = vpop.permute.xlu0 %78
  %80 = vset.pattern.permute.xlu0 0
  %81 = vperm.xlu0 %80, %v14
  %v82 = vpop.permute.xlu0 %81
  %83 = vset.pattern.permute.xlu0 0
  %84 = vperm.xlu0 %83, %v15
  %v85 = vpop.permute.xlu0 %84
  %86 = vset.pattern.permute.xlu0 0
  %87 = vperm.xlu0 %86, %v16
  %v88 = vpop.permute.xlu0 %87
  %89 = vset.pattern.permute.xlu0 0
  %90 = vperm.xlu0 %89, %v17
  %v91 = vpop.permute.xlu0 %90
  %92 = vset.pattern.permute.xlu0 0
  %93 = vperm.xlu0 %92, %v18
  %v94 = vpop.permute.xlu0 %93
  %95 = vset.pattern.permute.xlu0 0
  %96 = vperm.xlu0 %95, %v19
  %v97 = vpop.permute.xlu0 %96
  %98 = vset.pattern.permute.xlu0 0
  %99 = vperm.xlu0 %98, %v20
  %v100 = vpop.permute.xlu0 %99
  %101 = vset.pattern.permute.xlu0 0
  %102 = vperm.xlu0 %101, %v21
  %v103 = vpop.permute.xlu0 %102
  %104 = vset.pattern.permute.xlu0 0
  %105 = vperm.xlu0 %104, %v22
  %v106 = vpop.permute.xlu0 %105
  %107 = vset.pattern.permute.xlu0 0
  %108 = vperm.xlu0 %107, %v23
  %v109 = vpop.permute.xlu0 %108
  %110 = vset.pattern.permute.xlu0 0
  %111 = vperm.xlu0 %110, %v24
  %v112 = vpop.permute.xlu0 %111
  %113 = vset.pattern.permute.xlu0 0
  %114 = vperm.xlu0 %113, %v25
  %v115 = vpop.permute.xlu0 %114
  %116 = vset.pattern.permute.xlu0 0
  %117 = vperm.xlu0 %116, %v26
  %v118 = vpop.permute.xlu0 %117
  %119 = vset.pattern.permute.xlu0 0
  %120 = vperm.xlu0 %119, %v27
  %v121 = vpop.permute.xlu0 %120
  %122 = vset.pattern.permute.xlu0 0
  %123 = vperm.xlu0 %122, %v28
  %v124 = vpop.permute.xlu0 %123
  %125 = vset.pattern.permute.xlu0 0
  %126 = vperm.xlu0 %125, %v29
  %v127 = vpop.permute.xlu0 %126
  %128 = vset.pattern.permute.xlu0 0
  %129 = vperm.xlu0 %128, %v30
  %v130 = vpop.permute.xlu0 %129
  %131 = vset.pattern.permute.xlu0 0
  %132 = vperm.xlu0 %131, %v31
  %v133 = vpop.permute.xlu0 %132
  %134 = vset.pattern.permute.xlu0 0
  %135 = vperm.xlu0 %134, %v32
  %v136 = vpop.permute.xlu0 %135
  %137 = vset.pattern.permute.xlu0 0
  %138 = vperm.xlu0 %137, %v33
  %v139 = vpop.permute.xlu0 %138
  %140 = vset.pattern.permute.xlu0 0
  %141 = vperm.xlu0 %140, %v34
  %v142 = vpop.permute.xlu0 %141
  %143 = vset.pattern.permute.xlu0 0
  %144 = vperm.xlu0 %143, %v35
  %v145 = vpop.permute.xlu0 %144
  %146 = vset.pattern.permute.xlu0 0
  %147 = vperm.xlu0 %146, %v36
  %v148 = vpop.permute.xlu0 %147
  %149 = vset.pattern.permute.xlu0 0
  %150 = vperm.xlu0 %149, %v37
  %v151 = vpop.permute.xlu0 %150
  %152 = vset.pattern.permute.xlu0 0
  %153 = vperm.xlu0 %152, %v38
  %v154 = vpop.permute.xlu0 %153
  %155 = vset.pattern.permute.xlu0 0
  %156 = vperm.xlu0 %155, %v39
  %v157 = vpop.permute.xlu0 %156
  %158 = vset.pattern.permute.xlu0 0
  %159 = vperm.xlu0 %158, %v40
  %v160 = vpop.permute.xlu0 %159
  %161 = vset.pattern.permute.xlu0 0
  %162 = vperm.xlu0 %161, %v41
  %v163 = vpop.permute.xlu0 %162
  %164 = vset.pattern.permute.xlu0 0
  %165 = vperm.xlu0 %164, %v42
  %v166 = vpop.permute.xlu0 %165
  %167 = vset.pattern.permute.xlu0 0
  %168 = vperm.xlu0 %167, %v43
  %v169 = vpop.permute.xlu0 %168
  %170 = vset.pattern.permute.xlu0 0
  %171 = vperm.xlu0 %170, %v44
  %v172 = vpop.permute.xlu0 %171
  %173 = vset.pattern.permute.xlu0 0
  %174 = vperm.xlu0 %173, %v45
  %v175 = vpop.permute.xlu0 %174
  %176 = vset.pattern.permute.xlu0 0
  %177 = vperm.xlu0 %176, %v46
  %v178 = vpop.permute.xlu0 %177
  %179 = vset.pattern.permute.xlu0 0
  %180 = vperm.xlu0 %179, %v47
  %v181 = vpop.permute.xlu0 %180
  %182 = vset.pattern.permute.xlu0 0
  %183 = vperm.xlu0 %182, %v48
  %v184 = vpop.permute.xlu0 %183
  %185 = vset.pattern.permute.xlu0 0
  %186 = vperm.xlu0 %185, %v49
  %v187 = vpop.permute.xlu0 %186
  %188 = vset.pattern.permute.xlu0 0
  %189 = vperm.xlu0 %188, %v50
  %v190 = vpop.permute.xlu0 %189
  %191 = vset.pattern.permute.xlu0 0
  %192 = vperm.xlu0 %191, %v51
  %v193 = vpop.permute.xlu0 %192
  %194 = vset.pattern.permute.xlu0 0
  %195 = vperm.xlu0 %194, %v52
  %v196 = vpop.permute.xlu0 %195
  %197 = vset.pattern.permute.xlu0 0
  %198 = vperm.xlu0 %197, %v53
  %v199 = vpop.permute.xlu0 %198
  %200 = vset.pattern.permute.xlu0 0
  %201 = vperm.xlu0 %200, %v54
  %v202 = vpop.permute.xlu0 %201
  %203 = vset.pattern.permute.xlu0 0
  %204 = vperm.xlu0 %203, %v55
  %v205 = vpop.permute.xlu0 %204
  %206 = vset.pattern.permute.xlu0 0
  %207 = vperm.xlu0 %206, %v56
  %v208 = vpop.permute.xlu0 %207
  %209 = vset.pattern.permute.xlu0 0
  %210 = vperm.xlu0 %209, %v57
  %v211 = vpop.permute.xlu0 %210
  %212 = vset.pattern.permute.xlu0 0
  %213 = vperm.xlu0 %212, %v58
  %v214 = vpop.permute.xlu0 %213
  %215 = vset.pattern.permute.xlu0 0
  %216 = vperm.xlu0 %215, %v59
  %v217 = vpop.permute.xlu0 %216
  %218 = vset.pattern.permute.xlu0 0
  %219 = vperm.xlu0 %218, %v60
  %v220 = vpop.permute.xlu0 %219
  %221 = vset.pattern.permute.xlu0 0
  %222 = vperm.xlu0 %221, %v61
  %v223 = vpop.permute.xlu0 %222
  %224 = vset.pattern.permute.xlu0 0
  %225 = vperm.xlu0 %224, %v62
  %v226 = vpop.permute.xlu0 %225
  %227 = vset.pattern.permute.xlu0 0
  %228 = vperm.xlu0 %227, %v63
  %v229 = vpop.permute.xlu0 %228
  %230 = vset.pattern.permute.xlu0 0
  %231 = vperm.xlu0 %230, %v64
  %v232 = vpop.permute.xlu0 %231
  %233 = vset.pattern.permute.xlu0 0
  %234 = vperm.xlu0 %233, %v65
  %v235 = vpop.permute.xlu0 %234
  %236 = vset.pattern.permute.xlu0 0
  %237 = vperm.xlu0 %236, %v66
  %v238 = vpop.permute.xlu0 %237
  %239 = vset.pattern.permute.xlu0 0
  %240 = vperm.xlu0 %239, %v67
  %v241 = vpop.permute.xlu0 %240
  %242 = vset.pattern.permute.xlu0 0
  %243 = vperm.xlu0 %242, %v68
  %v244 = vpop.permute.xlu0 %243
  %245 = vset.pattern.permute.xlu0 0
  %246 = vperm.xlu0 %245, %v69
  %v247 = vpop.permute.xlu0 %246
  %248 = vset.pattern.permute.xlu0 0
  %249 = vperm.xlu0 %248, %v70
  %v250 = vpop.permute.xlu0 %249
  %251 = vset.pattern.permute.xlu0 0
  %252 = vperm.xlu0 %251, %v71
  %v253 = vpop.permute.xlu0 %252
  %254 = vset.pattern.permute.xlu0 0
  %255 = vperm.xlu0 %254, %v72
  %v256 = vpop.permute.xlu0 %255
  %257 = vset.pattern.permute.xlu0 0
  %258 = vperm.xlu0 %257, %v73
  %v259 = vpop.permute.xlu0 %258
  %260 = vset.pattern.permute.xlu0 0
  %261 = vperm.xlu0 %260, %v74
  %v262 = vpop.permute.xlu0 %261
  %263 = vset.pattern.permute.xlu0 0
  %264 = vperm.xlu0 %263, %v75
  %v265 = vpop.permute.xlu0 %264
  %266 = vset.pattern.permute.xlu0 0
  %267 = vperm.xlu0 %266, %v76
  %v268 = vpop.permute.xlu0 %267
  %vm269 = vcmp.eq.s32.totalorder %v12, %v79
  %vm270 = vcmp.eq.s32.totalorder %v12, %v82
  %vm271 = vcmp.eq.s32.totalorder %v12, %v85
  %vm272 = vcmp.eq.s32.totalorder %v12, %v88
  %vm273 = vcmp.eq.s32.totalorder %v12, %v91
  %vm274 = vcmp.eq.s32.totalorder %v12, %v94
  %vm275 = vcmp.eq.s32.totalorder %v12, %v97
  %vm276 = vcmp.eq.s32.totalorder %v12, %v100
  %vm277 = vcmp.eq.s32.totalorder %v12, %v103
  %vm278 = vcmp.eq.s32.totalorder %v12, %v106
  %vm279 = vcmp.eq.s32.totalorder %v12, %v109
  %vm280 = vcmp.eq.s32.totalorder %v12, %v112
  %vm281 = vcmp.eq.s32.totalorder %v12, %v115
  %vm282 = vcmp.eq.s32.totalorder %v12, %v118
  %vm283 = vcmp.eq.s32.totalorder %v12, %v121
  %vm284 = vcmp.eq.s32.totalorder %v12, %v124
  %vm285 = vcmp.eq.s32.totalorder %v12, %v127
  %vm286 = vcmp.eq.s32.totalorder %v12, %v130
  %vm287 = vcmp.eq.s32.totalorder %v12, %v133
  %vm288 = vcmp.eq.s32.totalorder %v12, %v136
  %vm289 = vcmp.eq.s32.totalorder %v12, %v139
  %vm290 = vcmp.eq.s32.totalorder %v12, %v142
  %vm291 = vcmp.eq.s32.totalorder %v12, %v145
  %vm292 = vcmp.eq.s32.totalorder %v12, %v148
  %vm293 = vcmp.eq.s32.totalorder %v12, %v151
  %vm294 = vcmp.eq.s32.totalorder %v12, %v154
  %vm295 = vcmp.eq.s32.totalorder %v12, %v157
  %vm296 = vcmp.eq.s32.totalorder %v12, %v160
  %vm297 = vcmp.eq.s32.totalorder %v12, %v163
  %vm298 = vcmp.eq.s32.totalorder %v12, %v166
  %vm299 = vcmp.eq.s32.totalorder %v12, %v169
  %vm300 = vcmp.eq.s32.totalorder %v12, %v172
  %vm301 = vcmp.eq.s32.totalorder %v12, %v175
  %vm302 = vcmp.eq.s32.totalorder %v12, %v178
  %vm303 = vcmp.eq.s32.totalorder %v12, %v181
  %vm304 = vcmp.eq.s32.totalorder %v12, %v184
  %vm305 = vcmp.eq.s32.totalorder %v12, %v187
  %vm306 = vcmp.eq.s32.totalorder %v12, %v190
  %vm307 = vcmp.eq.s32.totalorder %v12, %v193
  %vm308 = vcmp.eq.s32.totalorder %v12, %v196
  %vm309 = vcmp.eq.s32.totalorder %v12, %v199
  %vm310 = vcmp.eq.s32.totalorder %v12, %v202
  %vm311 = vcmp.eq.s32.totalorder %v12, %v205
  %vm312 = vcmp.eq.s32.totalorder %v12, %v208
  %vm313 = vcmp.eq.s32.totalorder %v12, %v211
  %vm314 = vcmp.eq.s32.totalorder %v12, %v214
  %vm315 = vcmp.eq.s32.totalorder %v12, %v217
  %vm316 = vcmp.eq.s32.totalorder %v12, %v220
  %vm317 = vcmp.eq.s32.totalorder %v12, %v223
  %vm318 = vcmp.eq.s32.totalorder %v12, %v226
  %vm319 = vcmp.eq.s32.totalorder %v12, %v229
  %vm320 = vcmp.eq.s32.totalorder %v12, %v232
  %vm321 = vcmp.eq.s32.totalorder %v12, %v235
  %vm322 = vcmp.eq.s32.totalorder %v12, %v238
  %vm323 = vcmp.eq.s32.totalorder %v12, %v241
  %vm324 = vcmp.eq.s32.totalorder %v12, %v244
  %vm325 = vcmp.eq.s32.totalorder %v12, %v247
  %vm326 = vcmp.eq.s32.totalorder %v12, %v250
  %vm327 = vcmp.eq.s32.totalorder %v12, %v253
  %vm328 = vcmp.eq.s32.totalorder %v12, %v256
  %vm329 = vcmp.eq.s32.totalorder %v12, %v259
  %vm330 = vcmp.eq.s32.totalorder %v12, %v262
  %vm331 = vcmp.eq.s32.totalorder %v12, %v265
  %vm332 = vcmp.eq.s32.totalorder %v12, %v268
  %v333 = vadd.s32 %v13, 5
  %v334 = vadd.s32 %v14, 5
  %v335 = vadd.s32 %v15, 5
  %v336 = vadd.s32 %v16, 5
  %v337 = vadd.s32 %v17, 5
  %v338 = vadd.s32 %v18, 5
  %v339 = vadd.s32 %v19, 5
  %v340 = vadd.s32 %v20, 5
  %v341 = vadd.s32 %v21, 5
  %v342 = vadd.s32 %v22, 5
  %v343 = vadd.s32 %v23, 5
  %v344 = vadd.s32 %v24, 5
  %v345 = vadd.s32 %v25, 5
  %v346 = vadd.s32 %v26, 5
  %v347 = vadd.s32 %v27, 5
  %v348 = vadd.s32 %v28, 5
  %v349 = vadd.s32 %v29, 5
  %v350 = vadd.s32 %v30, 5
  %v351 = vadd.s32 %v31, 5
  %v352 = vadd.s32 %v32, 5
  %v353 = vadd.s32 %v33, 5
  %v354 = vadd.s32 %v34, 5
  %v355 = vadd.s32 %v35, 5
  %v356 = vadd.s32 %v36, 5
  %v357 = vadd.s32 %v37, 5
  %v358 = vadd.s32 %v38, 5
  %v359 = vadd.s32 %v39, 5
  %v360 = vadd.s32 %v40, 5
  %v361 = vadd.s32 %v41, 5
  %v362 = vadd.s32 %v42, 5
  %v363 = vadd.s32 %v43, 5
  %v364 = vadd.s32 %v44, 5
  %v365 = vadd.s32 %v45, 5
  %v366 = vadd.s32 %v46, 5
  %v367 = vadd.s32 %v47, 5
  %v368 = vadd.s32 %v48, 5
  %v369 = vadd.s32 %v49, 5
  %v370 = vadd.s32 %v50, 5
  %v371 = vadd.s32 %v51, 5
  %v372 = vadd.s32 %v52, 5
  %v373 = vadd.s32 %v53, 5
  %v374 = vadd.s32 %v54, 5
  %v375 = vadd.s32 %v55, 5
  %v376 = vadd.s32 %v56, 5
  %v377 = vadd.s32 %v57, 5
  %v378 = vadd.s32 %v58, 5
  %v379 = vadd.s32 %v59, 5
  %v380 = vadd.s32 %v60, 5
  %v381 = vadd.s32 %v61, 5
  %v382 = vadd.s32 %v62, 5
  %v383 = vadd.s32 %v63, 5
  %v384 = vadd.s32 %v64, 5
  %v385 = vadd.s32 %v65, 5
  %v386 = vadd.s32 %v66, 5
  %v387 = vadd.s32 %v67, 5
  %v388 = vadd.s32 %v68, 5
  %v389 = vadd.s32 %v69, 5
  %v390 = vadd.s32 %v70, 5
  %v391 = vadd.s32 %v71, 5
  %v392 = vadd.s32 %v72, 5
  %v393 = vadd.s32 %v73, 5
  %v394 = vadd.s32 %v74, 5
  %v395 = vadd.s32 %v75, 5
  %v396 = vadd.s32 %v76, 5
  %397 = vset.pattern.permute.xlu0 1
  %398 = vperm.xlu0 %397, %v333
  %v399 = vpop.permute.xlu0 %398
  %400 = vset.pattern.permute.xlu0 1
  %401 = vperm.xlu0 %400, %v334
  %v402 = vpop.permute.xlu0 %401
  %403 = vset.pattern.permute.xlu0 1
  %404 = vperm.xlu0 %403, %v335
  %v405 = vpop.permute.xlu0 %404
  %406 = vset.pattern.permute.xlu0 1
  %407 = vperm.xlu0 %406, %v336
  %v408 = vpop.permute.xlu0 %407
  %409 = vset.pattern.permute.xlu0 1
  %410 = vperm.xlu0 %409, %v337
  %v411 = vpop.permute.xlu0 %410
  %412 = vset.pattern.permute.xlu0 1
  %413 = vperm.xlu0 %412, %v338
  %v414 = vpop.permute.xlu0 %413
  %415 = vset.pattern.permute.xlu0 1
  %416 = vperm.xlu0 %415, %v339
  %v417 = vpop.permute.xlu0 %416
  %418 = vset.pattern.permute.xlu0 1
  %419 = vperm.xlu0 %418, %v340
  %v420 = vpop.permute.xlu0 %419
  %421 = vset.pattern.permute.xlu0 1
  %422 = vperm.xlu0 %421, %v341
  %v423 = vpop.permute.xlu0 %422
  %424 = vset.pattern.permute.xlu0 1
  %425 = vperm.xlu0 %424, %v342
  %v426 = vpop.permute.xlu0 %425
  %427 = vset.pattern.permute.xlu0 1
  %428 = vperm.xlu0 %427, %v343
  %v429 = vpop.permute.xlu0 %428
  %430 = vset.pattern.permute.xlu0 1
  %431 = vperm.xlu0 %430, %v344
  %v432 = vpop.permute.xlu0 %431
  %433 = vset.pattern.permute.xlu0 1
  %434 = vperm.xlu0 %433, %v345
  %v435 = vpop.permute.xlu0 %434
  %436 = vset.pattern.permute.xlu0 1
  %437 = vperm.xlu0 %436, %v346
  %v438 = vpop.permute.xlu0 %437
  %439 = vset.pattern.permute.xlu0 1
  %440 = vperm.xlu0 %439, %v347
  %v441 = vpop.permute.xlu0 %440
  %442 = vset.pattern.permute.xlu0 1
  %443 = vperm.xlu0 %442, %v348
  %v444 = vpop.permute.xlu0 %443
  %445 = vset.pattern.permute.xlu0 1
  %446 = vperm.xlu0 %445, %v349
  %v447 = vpop.permute.xlu0 %446
  %448 = vset.pattern.permute.xlu0 1
  %449 = vperm.xlu0 %448, %v350
  %v450 = vpop.permute.xlu0 %449
  %451 = vset.pattern.permute.xlu0 1
  %452 = vperm.xlu0 %451, %v351
  %v453 = vpop.permute.xlu0 %452
  %454 = vset.pattern.permute.xlu0 1
  %455 = vperm.xlu0 %454, %v352
  %v456 = vpop.permute.xlu0 %455
  %457 = vset.pattern.permute.xlu0 1
  %458 = vperm.xlu0 %457, %v353
  %v459 = vpop.permute.xlu0 %458
  %460 = vset.pattern.permute.xlu0 1
  %461 = vperm.xlu0 %460, %v354
  %v462 = vpop.permute.xlu0 %461
  %463 = vset.pattern.permute.xlu0 1
  %464 = vperm.xlu0 %463, %v355
  %v465 = vpop.permute.xlu0 %464
  %466 = vset.pattern.permute.xlu0 1
  %467 = vperm.xlu0 %466, %v356
  %v468 = vpop.permute.xlu0 %467
  %469 = vset.pattern.permute.xlu0 1
  %470 = vperm.xlu0 %469, %v357
  %v471 = vpop.permute.xlu0 %470
  %472 = vset.pattern.permute.xlu0 1
  %473 = vperm.xlu0 %472, %v358
  %v474 = vpop.permute.xlu0 %473
  %475 = vset.pattern.permute.xlu0 1
  %476 = vperm.xlu0 %475, %v359
  %v477 = vpop.permute.xlu0 %476
  %478 = vset.pattern.permute.xlu0 1
  %479 = vperm.xlu0 %478, %v360
  %v480 = vpop.permute.xlu0 %479
  %481 = vset.pattern.permute.xlu0 1
  %482 = vperm.xlu0 %481, %v361
  %v483 = vpop.permute.xlu0 %482
  %484 = vset.pattern.permute.xlu0 1
  %485 = vperm.xlu0 %484, %v362
  %v486 = vpop.permute.xlu0 %485
  %487 = vset.pattern.permute.xlu0 1
  %488 = vperm.xlu0 %487, %v363
  %v489 = vpop.permute.xlu0 %488
  %490 = vset.pattern.permute.xlu0 1
  %491 = vperm.xlu0 %490, %v364
  %v492 = vpop.permute.xlu0 %491
  %493 = vset.pattern.permute.xlu0 1
  %494 = vperm.xlu0 %493, %v365
  %v495 = vpop.permute.xlu0 %494
  %496 = vset.pattern.permute.xlu0 1
  %497 = vperm.xlu0 %496, %v366
  %v498 = vpop.permute.xlu0 %497
  %499 = vset.pattern.permute.xlu0 1
  %500 = vperm.xlu0 %499, %v367
  %v501 = vpop.permute.xlu0 %500
  %502 = vset.pattern.permute.xlu0 1
  %503 = vperm.xlu0 %502, %v368
  %v504 = vpop.permute.xlu0 %503
  %505 = vset.pattern.permute.xlu0 1
  %506 = vperm.xlu0 %505, %v369
  %v507 = vpop.permute.xlu0 %506
  %508 = vset.pattern.permute.xlu0 1
  %509 = vperm.xlu0 %508, %v370
  %v510 = vpop.permute.xlu0 %509
  %511 = vset.pattern.permute.xlu0 1
  %512 = vperm.xlu0 %511, %v371
  %v513 = vpop.permute.xlu0 %512
  %514 = vset.pattern.permute.xlu0 1
  %515 = vperm.xlu0 %514, %v372
  %v516 = vpop.permute.xlu0 %515
  %517 = vset.pattern.permute.xlu0 1
  %518 = vperm.xlu0 %517, %v373
  %v519 = vpop.permute.xlu0 %518
  %520 = vset.pattern.permute.xlu0 1
  %521 = vperm.xlu0 %520, %v374
  %v522 = vpop.permute.xlu0 %521
  %523 = vset.pattern.permute.xlu0 1
  %524 = vperm.xlu0 %523, %v375
  %v525 = vpop.permute.xlu0 %524
  %526 = vset.pattern.permute.xlu0 1
  %527 = vperm.xlu0 %526, %v376
  %v528 = vpop.permute.xlu0 %527
  %529 = vset.pattern.permute.xlu0 1
  %530 = vperm.xlu0 %529, %v377
  %v531 = vpop.permute.xlu0 %530
  %532 = vset.pattern.permute.xlu0 1
  %533 = vperm.xlu0 %532, %v378
  %v534 = vpop.permute.xlu0 %533
  %535 = vset.pattern.permute.xlu0 1
  %536 = vperm.xlu0 %535, %v379
  %v537 = vpop.permute.xlu0 %536
  %538 = vset.pattern.permute.xlu0 1
  %539 = vperm.xlu0 %538, %v380
  %v540 = vpop.permute.xlu0 %539
  %541 = vset.pattern.permute.xlu0 1
  %542 = vperm.xlu0 %541, %v381
  %v543 = vpop.permute.xlu0 %542
  %544 = vset.pattern.permute.xlu0 1
  %545 = vperm.xlu0 %544, %v382
  %v546 = vpop.permute.xlu0 %545
  %547 = vset.pattern.permute.xlu0 1
  %548 = vperm.xlu0 %547, %v383
  %v549 = vpop.permute.xlu0 %548
  %550 = vset.pattern.permute.xlu0 1
  %551 = vperm.xlu0 %550, %v384
  %v552 = vpop.permute.xlu0 %551
  %553 = vset.pattern.permute.xlu0 1
  %554 = vperm.xlu0 %553, %v385
  %v555 = vpop.permute.xlu0 %554
  %556 = vset.pattern.permute.xlu0 1
  %557 = vperm.xlu0 %556, %v386
  %v558 = vpop.permute.xlu0 %557
  %559 = vset.pattern.permute.xlu0 1
  %560 = vperm.xlu0 %559, %v387
  %v561 = vpop.permute.xlu0 %560
  %562 = vset.pattern.permute.xlu0 1
  %563 = vperm.xlu0 %562, %v388
  %v564 = vpop.permute.xlu0 %563
  %565 = vset.pattern.permute.xlu0 1
  %566 = vperm.xlu0 %565, %v389
  %v567 = vpop.permute.xlu0 %566
  %568 = vset.pattern.permute.xlu0 1
  %569 = vperm.xlu0 %568, %v390
  %v570 = vpop.permute.xlu0 %569
  %571 = vset.pattern.permute.xlu0 1
  %572 = vperm.xlu0 %571, %v391
  %v573 = vpop.permute.xlu0 %572
  %574 = vset.pattern.permute.xlu0 1
  %575 = vperm.xlu0 %574, %v392
  %v576 = vpop.permute.xlu0 %575
  %577 = vset.pattern.permute.xlu0 1
  %578 = vperm.xlu0 %577, %v393
  %v579 = vpop.permute.xlu0 %578
  %580 = vset.pattern.permute.xlu0 1
  %581 = vperm.xlu0 %580, %v394
  %v582 = vpop.permute.xlu0 %581
  %583 = vset.pattern.permute.xlu0 1
  %584 = vperm.xlu0 %583, %v395
  %v585 = vpop.permute.xlu0 %584
  %586 = vset.pattern.permute.xlu0 1
  %587 = vperm.xlu0 %586, %v396
  %v588 = vpop.permute.xlu0 %587
  %vm589 = vcmp.eq.s32.totalorder %v12, %v399
  %vm590 = vcmp.eq.s32.totalorder %v12, %v402
  %vm591 = vcmp.eq.s32.totalorder %v12, %v405
  %vm592 = vcmp.eq.s32.totalorder %v12, %v408
  %vm593 = vcmp.eq.s32.totalorder %v12, %v411
  %vm594 = vcmp.eq.s32.totalorder %v12, %v414
  %vm595 = vcmp.eq.s32.totalorder %v12, %v417
  %vm596 = vcmp.eq.s32.totalorder %v12, %v420
  %vm597 = vcmp.eq.s32.totalorder %v12, %v423
  %vm598 = vcmp.eq.s32.totalorder %v12, %v426
  %vm599 = vcmp.eq.s32.totalorder %v12, %v429
  %vm600 = vcmp.eq.s32.totalorder %v12, %v432
  %vm601 = vcmp.eq.s32.totalorder %v12, %v435
  %vm602 = vcmp.eq.s32.totalorder %v12, %v438
  %vm603 = vcmp.eq.s32.totalorder %v12, %v441
  %vm604 = vcmp.eq.s32.totalorder %v12, %v444
  %vm605 = vcmp.eq.s32.totalorder %v12, %v447
  %vm606 = vcmp.eq.s32.totalorder %v12, %v450
  %vm607 = vcmp.eq.s32.totalorder %v12, %v453
  %vm608 = vcmp.eq.s32.totalorder %v12, %v456
  %vm609 = vcmp.eq.s32.totalorder %v12, %v459
  %vm610 = vcmp.eq.s32.totalorder %v12, %v462
  %vm611 = vcmp.eq.s32.totalorder %v12, %v465
  %vm612 = vcmp.eq.s32.totalorder %v12, %v468
  %vm613 = vcmp.eq.s32.totalorder %v12, %v471
  %vm614 = vcmp.eq.s32.totalorder %v12, %v474
  %vm615 = vcmp.eq.s32.totalorder %v12, %v477
  %vm616 = vcmp.eq.s32.totalorder %v12, %v480
  %vm617 = vcmp.eq.s32.totalorder %v12, %v483
  %vm618 = vcmp.eq.s32.totalorder %v12, %v486
  %vm619 = vcmp.eq.s32.totalorder %v12, %v489
  %vm620 = vcmp.eq.s32.totalorder %v12, %v492
  %vm621 = vcmp.eq.s32.totalorder %v12, %v495
  %vm622 = vcmp.eq.s32.totalorder %v12, %v498
  %vm623 = vcmp.eq.s32.totalorder %v12, %v501
  %vm624 = vcmp.eq.s32.totalorder %v12, %v504
  %vm625 = vcmp.eq.s32.totalorder %v12, %v507
  %vm626 = vcmp.eq.s32.totalorder %v12, %v510
  %vm627 = vcmp.eq.s32.totalorder %v12, %v513
  %vm628 = vcmp.eq.s32.totalorder %v12, %v516
  %vm629 = vcmp.eq.s32.totalorder %v12, %v519
  %vm630 = vcmp.eq.s32.totalorder %v12, %v522
  %vm631 = vcmp.eq.s32.totalorder %v12, %v525
  %vm632 = vcmp.eq.s32.totalorder %v12, %v528
  %vm633 = vcmp.eq.s32.totalorder %v12, %v531
  %vm634 = vcmp.eq.s32.totalorder %v12, %v534
  %vm635 = vcmp.eq.s32.totalorder %v12, %v537
  %vm636 = vcmp.eq.s32.totalorder %v12, %v540
  %vm637 = vcmp.eq.s32.totalorder %v12, %v543
  %vm638 = vcmp.eq.s32.totalorder %v12, %v546
  %vm639 = vcmp.eq.s32.totalorder %v12, %v549
  %vm640 = vcmp.eq.s32.totalorder %v12, %v552
  %vm641 = vcmp.eq.s32.totalorder %v12, %v555
  %vm642 = vcmp.eq.s32.totalorder %v12, %v558
  %vm643 = vcmp.eq.s32.totalorder %v12, %v561
  %vm644 = vcmp.eq.s32.totalorder %v12, %v564
  %vm645 = vcmp.eq.s32.totalorder %v12, %v567
  %vm646 = vcmp.eq.s32.totalorder %v12, %v570
  %vm647 = vcmp.eq.s32.totalorder %v12, %v573
  %vm648 = vcmp.eq.s32.totalorder %v12, %v576
  %vm649 = vcmp.eq.s32.totalorder %v12, %v579
  %vm650 = vcmp.eq.s32.totalorder %v12, %v582
  %vm651 = vcmp.eq.s32.totalorder %v12, %v585
  %vm652 = vcmp.eq.s32.totalorder %v12, %v588
  %vm653 = vmor %vm269, %vm589
  %vm654 = vmor %vm270, %vm590
  %vm655 = vmor %vm271, %vm591
  %vm656 = vmor %vm272, %vm592
  %vm657 = vmor %vm273, %vm593
  %vm658 = vmor %vm274, %vm594
  %vm659 = vmor %vm275, %vm595
  %vm660 = vmor %vm276, %vm596
  %vm661 = vmor %vm277, %vm597
  %vm662 = vmor %vm278, %vm598
  %vm663 = vmor %vm279, %vm599
  %vm664 = vmor %vm280, %vm600
  %vm665 = vmor %vm281, %vm601
  %vm666 = vmor %vm282, %vm602
  %vm667 = vmor %vm283, %vm603
  %vm668 = vmor %vm284, %vm604
  %vm669 = vmor %vm285, %vm605
  %vm670 = vmor %vm286, %vm606
  %vm671 = vmor %vm287, %vm607
  %vm672 = vmor %vm288, %vm608
  %vm673 = vmor %vm289, %vm609
  %vm674 = vmor %vm290, %vm610
  %vm675 = vmor %vm291, %vm611
  %vm676 = vmor %vm292, %vm612
  %vm677 = vmor %vm293, %vm613
  %vm678 = vmor %vm294, %vm614
  %vm679 = vmor %vm295, %vm615
  %vm680 = vmor %vm296, %vm616
  %vm681 = vmor %vm297, %vm617
  %vm682 = vmor %vm298, %vm618
  %vm683 = vmor %vm299, %vm619
  %vm684 = vmor %vm300, %vm620
  %vm685 = vmor %vm301, %vm621
  %vm686 = vmor %vm302, %vm622
  %vm687 = vmor %vm303, %vm623
  %vm688 = vmor %vm304, %vm624
  %vm689 = vmor %vm305, %vm625
  %vm690 = vmor %vm306, %vm626
  %vm691 = vmor %vm307, %vm627
  %vm692 = vmor %vm308, %vm628
  %vm693 = vmor %vm309, %vm629
  %vm694 = vmor %vm310, %vm630
  %vm695 = vmor %vm311, %vm631
  %vm696 = vmor %vm312, %vm632
  %vm697 = vmor %vm313, %vm633
  %vm698 = vmor %vm314, %vm634
  %vm699 = vmor %vm315, %vm635
  %vm700 = vmor %vm316, %vm636
  %vm701 = vmor %vm317, %vm637
  %vm702 = vmor %vm318, %vm638
  %vm703 = vmor %vm319, %vm639
  %vm704 = vmor %vm320, %vm640
  %vm705 = vmor %vm321, %vm641
  %vm706 = vmor %vm322, %vm642
  %vm707 = vmor %vm323, %vm643
  %vm708 = vmor %vm324, %vm644
  %vm709 = vmor %vm325, %vm645
  %vm710 = vmor %vm326, %vm646
  %vm711 = vmor %vm327, %vm647
  %vm712 = vmor %vm328, %vm648
  %vm713 = vmor %vm329, %vm649
  %vm714 = vmor %vm330, %vm650
  %vm715 = vmor %vm331, %vm651
  %vm716 = vmor %vm332, %vm652
  %v717 = vadd.s32 %v13, 11
  %v718 = vadd.s32 %v14, 11
  %v719 = vadd.s32 %v15, 11
  %v720 = vadd.s32 %v16, 11
  %v721 = vadd.s32 %v17, 11
  %v722 = vadd.s32 %v18, 11
  %v723 = vadd.s32 %v19, 11
  %v724 = vadd.s32 %v20, 11
  %v725 = vadd.s32 %v21, 11
  %v726 = vadd.s32 %v22, 11
  %v727 = vadd.s32 %v23, 11
  %v728 = vadd.s32 %v24, 11
  %v729 = vadd.s32 %v25, 11
  %v730 = vadd.s32 %v26, 11
  %v731 = vadd.s32 %v27, 11
  %v732 = vadd.s32 %v28, 11
  %v733 = vadd.s32 %v29, 11
  %v734 = vadd.s32 %v30, 11
  %v735 = vadd.s32 %v31, 11
  %v736 = vadd.s32 %v32, 11
  %v737 = vadd.s32 %v33, 11
  %v738 = vadd.s32 %v34, 11
  %v739 = vadd.s32 %v35, 11
  %v740 = vadd.s32 %v36, 11
  %v741 = vadd.s32 %v37, 11
  %v742 = vadd.s32 %v38, 11
  %v743 = vadd.s32 %v39, 11
  %v744 = vadd.s32 %v40, 11
  %v745 = vadd.s32 %v41, 11
  %v746 = vadd.s32 %v42, 11
  %v747 = vadd.s32 %v43, 11
  %v748 = vadd.s32 %v44, 11
  %v749 = vadd.s32 %v45, 11
  %v750 = vadd.s32 %v46, 11
  %v751 = vadd.s32 %v47, 11
  %v752 = vadd.s32 %v48, 11
  %v753 = vadd.s32 %v49, 11
  %v754 = vadd.s32 %v50, 11
  %v755 = vadd.s32 %v51, 11
  %v756 = vadd.s32 %v52, 11
  %v757 = vadd.s32 %v53, 11
  %v758 = vadd.s32 %v54, 11
  %v759 = vadd.s32 %v55, 11
  %v760 = vadd.s32 %v56, 11
  %v761 = vadd.s32 %v57, 11
  %v762 = vadd.s32 %v58, 11
  %v763 = vadd.s32 %v59, 11
  %v764 = vadd.s32 %v60, 11
  %v765 = vadd.s32 %v61, 11
  %v766 = vadd.s32 %v62, 11
  %v767 = vadd.s32 %v63, 11
  %v768 = vadd.s32 %v64, 11
  %v769 = vadd.s32 %v65, 11
  %v770 = vadd.s32 %v66, 11
  %v771 = vadd.s32 %v67, 11
  %v772 = vadd.s32 %v68, 11
  %v773 = vadd.s32 %v69, 11
  %v774 = vadd.s32 %v70, 11
  %v775 = vadd.s32 %v71, 11
  %v776 = vadd.s32 %v72, 11
  %v777 = vadd.s32 %v73, 11
  %v778 = vadd.s32 %v74, 11
  %v779 = vadd.s32 %v75, 11
  %v780 = vadd.s32 %v76, 11
  %781 = vset.pattern.permute.xlu0 2
  %782 = vperm.xlu0 %781, %v717
  %v783 = vpop.permute.xlu0 %782
  %784 = vset.pattern.permute.xlu0 2
  %785 = vperm.xlu0 %784, %v718
  %v786 = vpop.permute.xlu0 %785
  %787 = vset.pattern.permute.xlu0 2
  %788 = vperm.xlu0 %787, %v719
  %v789 = vpop.permute.xlu0 %788
  %790 = vset.pattern.permute.xlu0 2
  %791 = vperm.xlu0 %790, %v720
  %v792 = vpop.permute.xlu0 %791
  %793 = vset.pattern.permute.xlu0 2
  %794 = vperm.xlu0 %793, %v721
  %v795 = vpop.permute.xlu0 %794
  %796 = vset.pattern.permute.xlu0 2
  %797 = vperm.xlu0 %796, %v722
  %v798 = vpop.permute.xlu0 %797
  %799 = vset.pattern.permute.xlu0 2
  %800 = vperm.xlu0 %799, %v723
  %v801 = vpop.permute.xlu0 %800
  %802 = vset.pattern.permute.xlu0 2
  %803 = vperm.xlu0 %802, %v724
  %v804 = vpop.permute.xlu0 %803
  %805 = vset.pattern.permute.xlu0 2
  %806 = vperm.xlu0 %805, %v725
  %v807 = vpop.permute.xlu0 %806
  %808 = vset.pattern.permute.xlu0 2
  %809 = vperm.xlu0 %808, %v726
  %v810 = vpop.permute.xlu0 %809
  %811 = vset.pattern.permute.xlu0 2
  %812 = vperm.xlu0 %811, %v727
  %v813 = vpop.permute.xlu0 %812
  %814 = vset.pattern.permute.xlu0 2
  %815 = vperm.xlu0 %814, %v728
  %v816 = vpop.permute.xlu0 %815
  %817 = vset.pattern.permute.xlu0 2
  %818 = vperm.xlu0 %817, %v729
  %v819 = vpop.permute.xlu0 %818
  %820 = vset.pattern.permute.xlu0 2
  %821 = vperm.xlu0 %820, %v730
  %v822 = vpop.permute.xlu0 %821
  %823 = vset.pattern.permute.xlu0 2
  %824 = vperm.xlu0 %823, %v731
  %v825 = vpop.permute.xlu0 %824
  %826 = vset.pattern.permute.xlu0 2
  %827 = vperm.xlu0 %826, %v732
  %v828 = vpop.permute.xlu0 %827
  %829 = vset.pattern.permute.xlu0 2
  %830 = vperm.xlu0 %829, %v733
  %v831 = vpop.permute.xlu0 %830
  %832 = vset.pattern.permute.xlu0 2
  %833 = vperm.xlu0 %832, %v734
  %v834 = vpop.permute.xlu0 %833
  %835 = vset.pattern.permute.xlu0 2
  %836 = vperm.xlu0 %835, %v735
  %v837 = vpop.permute.xlu0 %836
  %838 = vset.pattern.permute.xlu0 2
  %839 = vperm.xlu0 %838, %v736
  %v840 = vpop.permute.xlu0 %839
  %841 = vset.pattern.permute.xlu0 2
  %842 = vperm.xlu0 %841, %v737
  %v843 = vpop.permute.xlu0 %842
  %844 = vset.pattern.permute.xlu0 2
  %845 = vperm.xlu0 %844, %v738
  %v846 = vpop.permute.xlu0 %845
  %847 = vset.pattern.permute.xlu0 2
  %848 = vperm.xlu0 %847, %v739
  %v849 = vpop.permute.xlu0 %848
  %850 = vset.pattern.permute.xlu0 2
  %851 = vperm.xlu0 %850, %v740
  %v852 = vpop.permute.xlu0 %851
  %853 = vset.pattern.permute.xlu0 2
  %854 = vperm.xlu0 %853, %v741
  %v855 = vpop.permute.xlu0 %854
  %856 = vset.pattern.permute.xlu0 2
  %857 = vperm.xlu0 %856, %v742
  %v858 = vpop.permute.xlu0 %857
  %859 = vset.pattern.permute.xlu0 2
  %860 = vperm.xlu0 %859, %v743
  %v861 = vpop.permute.xlu0 %860
  %862 = vset.pattern.permute.xlu0 2
  %863 = vperm.xlu0 %862, %v744
  %v864 = vpop.permute.xlu0 %863
  %865 = vset.pattern.permute.xlu0 2
  %866 = vperm.xlu0 %865, %v745
  %v867 = vpop.permute.xlu0 %866
  %868 = vset.pattern.permute.xlu0 2
  %869 = vperm.xlu0 %868, %v746
  %v870 = vpop.permute.xlu0 %869
  %871 = vset.pattern.permute.xlu0 2
  %872 = vperm.xlu0 %871, %v747
  %v873 = vpop.permute.xlu0 %872
  %874 = vset.pattern.permute.xlu0 2
  %875 = vperm.xlu0 %874, %v748
  %v876 = vpop.permute.xlu0 %875
  %877 = vset.pattern.permute.xlu0 2
  %878 = vperm.xlu0 %877, %v749
  %v879 = vpop.permute.xlu0 %878
  %880 = vset.pattern.permute.xlu0 2
  %881 = vperm.xlu0 %880, %v750
  %v882 = vpop.permute.xlu0 %881
  %883 = vset.pattern.permute.xlu0 2
  %884 = vperm.xlu0 %883, %v751
  %v885 = vpop.permute.xlu0 %884
  %886 = vset.pattern.permute.xlu0 2
  %887 = vperm.xlu0 %886, %v752
  %v888 = vpop.permute.xlu0 %887
  %889 = vset.pattern.permute.xlu0 2
  %890 = vperm.xlu0 %889, %v753
  %v891 = vpop.permute.xlu0 %890
  %892 = vset.pattern.permute.xlu0 2
  %893 = vperm.xlu0 %892, %v754
  %v894 = vpop.permute.xlu0 %893
  %895 = vset.pattern.permute.xlu0 2
  %896 = vperm.xlu0 %895, %v755
  %v897 = vpop.permute.xlu0 %896
  %898 = vset.pattern.permute.xlu0 2
  %899 = vperm.xlu0 %898, %v756
  %v900 = vpop.permute.xlu0 %899
  %901 = vset.pattern.permute.xlu0 2
  %902 = vperm.xlu0 %901, %v757
  %v903 = vpop.permute.xlu0 %902
  %904 = vset.pattern.permute.xlu0 2
  %905 = vperm.xlu0 %904, %v758
  %v906 = vpop.permute.xlu0 %905
  %907 = vset.pattern.permute.xlu0 2
  %908 = vperm.xlu0 %907, %v759
  %v909 = vpop.permute.xlu0 %908
  %910 = vset.pattern.permute.xlu0 2
  %911 = vperm.xlu0 %910, %v760
  %v912 = vpop.permute.xlu0 %911
  %913 = vset.pattern.permute.xlu0 2
  %914 = vperm.xlu0 %913, %v761
  %v915 = vpop.permute.xlu0 %914
  %916 = vset.pattern.permute.xlu0 2
  %917 = vperm.xlu0 %916, %v762
  %v918 = vpop.permute.xlu0 %917
  %919 = vset.pattern.permute.xlu0 2
  %920 = vperm.xlu0 %919, %v763
  %v921 = vpop.permute.xlu0 %920
  %922 = vset.pattern.permute.xlu0 2
  %923 = vperm.xlu0 %922, %v764
  %v924 = vpop.permute.xlu0 %923
  %925 = vset.pattern.permute.xlu0 2
  %926 = vperm.xlu0 %925, %v765
  %v927 = vpop.permute.xlu0 %926
  %928 = vset.pattern.permute.xlu0 2
  %929 = vperm.xlu0 %928, %v766
  %v930 = vpop.permute.xlu0 %929
  %931 = vset.pattern.permute.xlu0 2
  %932 = vperm.xlu0 %931, %v767
  %v933 = vpop.permute.xlu0 %932
  %934 = vset.pattern.permute.xlu0 2
  %935 = vperm.xlu0 %934, %v768
  %v936 = vpop.permute.xlu0 %935
  %937 = vset.pattern.permute.xlu0 2
  %938 = vperm.xlu0 %937, %v769
  %v939 = vpop.permute.xlu0 %938
  %940 = vset.pattern.permute.xlu0 2
  %941 = vperm.xlu0 %940, %v770
  %v942 = vpop.permute.xlu0 %941
  %943 = vset.pattern.permute.xlu0 2
  %944 = vperm.xlu0 %943, %v771
  %v945 = vpop.permute.xlu0 %944
  %946 = vset.pattern.permute.xlu0 2
  %947 = vperm.xlu0 %946, %v772
  %v948 = vpop.permute.xlu0 %947
  %949 = vset.pattern.permute.xlu0 2
  %950 = vperm.xlu0 %949, %v773
  %v951 = vpop.permute.xlu0 %950
  %952 = vset.pattern.permute.xlu0 2
  %953 = vperm.xlu0 %952, %v774
  %v954 = vpop.permute.xlu0 %953
  %955 = vset.pattern.permute.xlu0 2
  %956 = vperm.xlu0 %955, %v775
  %v957 = vpop.permute.xlu0 %956
  %958 = vset.pattern.permute.xlu0 2
  %959 = vperm.xlu0 %958, %v776
  %v960 = vpop.permute.xlu0 %959
  %961 = vset.pattern.permute.xlu0 2
  %962 = vperm.xlu0 %961, %v777
  %v963 = vpop.permute.xlu0 %962
  %964 = vset.pattern.permute.xlu0 2
  %965 = vperm.xlu0 %964, %v778
  %v966 = vpop.permute.xlu0 %965
  %967 = vset.pattern.permute.xlu0 2
  %968 = vperm.xlu0 %967, %v779
  %v969 = vpop.permute.xlu0 %968
  %970 = vset.pattern.permute.xlu0 2
  %971 = vperm.xlu0 %970, %v780
  %v972 = vpop.permute.xlu0 %971
  %vm973 = vcmp.eq.s32.totalorder %v12, %v783
  %vm974 = vcmp.eq.s32.totalorder %v12, %v786
  %vm975 = vcmp.eq.s32.totalorder %v12, %v789
  %vm976 = vcmp.eq.s32.totalorder %v12, %v792
  %vm977 = vcmp.eq.s32.totalorder %v12, %v795
  %vm978 = vcmp.eq.s32.totalorder %v12, %v798
  %vm979 = vcmp.eq.s32.totalorder %v12, %v801
  %vm980 = vcmp.eq.s32.totalorder %v12, %v804
  %vm981 = vcmp.eq.s32.totalorder %v12, %v807
  %vm982 = vcmp.eq.s32.totalorder %v12, %v810
  %vm983 = vcmp.eq.s32.totalorder %v12, %v813
  %vm984 = vcmp.eq.s32.totalorder %v12, %v816
  %vm985 = vcmp.eq.s32.totalorder %v12, %v819
  %vm986 = vcmp.eq.s32.totalorder %v12, %v822
  %vm987 = vcmp.eq.s32.totalorder %v12, %v825
  %vm988 = vcmp.eq.s32.totalorder %v12, %v828
  %vm989 = vcmp.eq.s32.totalorder %v12, %v831
  %vm990 = vcmp.eq.s32.totalorder %v12, %v834
  %vm991 = vcmp.eq.s32.totalorder %v12, %v837
  %vm992 = vcmp.eq.s32.totalorder %v12, %v840
  %vm993 = vcmp.eq.s32.totalorder %v12, %v843
  %vm994 = vcmp.eq.s32.totalorder %v12, %v846
  %vm995 = vcmp.eq.s32.totalorder %v12, %v849
  %vm996 = vcmp.eq.s32.totalorder %v12, %v852
  %vm997 = vcmp.eq.s32.totalorder %v12, %v855
  %vm998 = vcmp.eq.s32.totalorder %v12, %v858
  %vm999 = vcmp.eq.s32.totalorder %v12, %v861
  %vm1000 = vcmp.eq.s32.totalorder %v12, %v864
  %vm1001 = vcmp.eq.s32.totalorder %v12, %v867
  %vm1002 = vcmp.eq.s32.totalorder %v12, %v870
  %vm1003 = vcmp.eq.s32.totalorder %v12, %v873
  %vm1004 = vcmp.eq.s32.totalorder %v12, %v876
  %vm1005 = vcmp.eq.s32.totalorder %v12, %v879
  %vm1006 = vcmp.eq.s32.totalorder %v12, %v882
  %vm1007 = vcmp.eq.s32.totalorder %v12, %v885
  %vm1008 = vcmp.eq.s32.totalorder %v12, %v888
  %vm1009 = vcmp.eq.s32.totalorder %v12, %v891
  %vm1010 = vcmp.eq.s32.totalorder %v12, %v894
  %vm1011 = vcmp.eq.s32.totalorder %v12, %v897
  %vm1012 = vcmp.eq.s32.totalorder %v12, %v900
  %vm1013 = vcmp.eq.s32.totalorder %v12, %v903
  %vm1014 = vcmp.eq.s32.totalorder %v12, %v906
  %vm1015 = vcmp.eq.s32.totalorder %v12, %v909
  %vm1016 = vcmp.eq.s32.totalorder %v12, %v912
  %vm1017 = vcmp.eq.s32.totalorder %v12, %v915
  %vm1018 = vcmp.eq.s32.totalorder %v12, %v918
  %vm1019 = vcmp.eq.s32.totalorder %v12, %v921
  %vm1020 = vcmp.eq.s32.totalorder %v12, %v924
  %vm1021 = vcmp.eq.s32.totalorder %v12, %v927
  %vm1022 = vcmp.eq.s32.totalorder %v12, %v930
  %vm1023 = vcmp.eq.s32.totalorder %v12, %v933
  %vm1024 = vcmp.eq.s32.totalorder %v12, %v936
  %vm1025 = vcmp.eq.s32.totalorder %v12, %v939
  %vm1026 = vcmp.eq.s32.totalorder %v12, %v942
  %vm1027 = vcmp.eq.s32.totalorder %v12, %v945
  %vm1028 = vcmp.eq.s32.totalorder %v12, %v948
  %vm1029 = vcmp.eq.s32.totalorder %v12, %v951
  %vm1030 = vcmp.eq.s32.totalorder %v12, %v954
  %vm1031 = vcmp.eq.s32.totalorder %v12, %v957
  %vm1032 = vcmp.eq.s32.totalorder %v12, %v960
  %vm1033 = vcmp.eq.s32.totalorder %v12, %v963
  %vm1034 = vcmp.eq.s32.totalorder %v12, %v966
  %vm1035 = vcmp.eq.s32.totalorder %v12, %v969
  %vm1036 = vcmp.eq.s32.totalorder %v12, %v972
  %vm1037 = vmor %vm653, %vm973
  %vm1038 = vmor %vm654, %vm974
  %vm1039 = vmor %vm655, %vm975
  %vm1040 = vmor %vm656, %vm976
  %vm1041 = vmor %vm657, %vm977
  %vm1042 = vmor %vm658, %vm978
  %vm1043 = vmor %vm659, %vm979
  %vm1044 = vmor %vm660, %vm980
  %vm1045 = vmor %vm661, %vm981
  %vm1046 = vmor %vm662, %vm982
  %vm1047 = vmor %vm663, %vm983
  %vm1048 = vmor %vm664, %vm984
  %vm1049 = vmor %vm665, %vm985
  %vm1050 = vmor %vm666, %vm986
  %vm1051 = vmor %vm667, %vm987
  %vm1052 = vmor %vm668, %vm988
  %vm1053 = vmor %vm669, %vm989
  %vm1054 = vmor %vm670, %vm990
  %vm1055 = vmor %vm671, %vm991
  %vm1056 = vmor %vm672, %vm992
  %vm1057 = vmor %vm673, %vm993
  %vm1058 = vmor %vm674, %vm994
  %vm1059 = vmor %vm675, %vm995
  %vm1060 = vmor %vm676, %vm996
  %vm1061 = vmor %vm677, %vm997
  %vm1062 = vmor %vm678, %vm998
  %vm1063 = vmor %vm679, %vm999
  %vm1064 = vmor %vm680, %vm1000
  %vm1065 = vmor %vm681, %vm1001
  %vm1066 = vmor %vm682, %vm1002
  %vm1067 = vmor %vm683, %vm1003
  %vm1068 = vmor %vm684, %vm1004
  %vm1069 = vmor %vm685, %vm1005
  %vm1070 = vmor %vm686, %vm1006
  %vm1071 = vmor %vm687, %vm1007
  %vm1072 = vmor %vm688, %vm1008
  %vm1073 = vmor %vm689, %vm1009
  %vm1074 = vmor %vm690, %vm1010
  %vm1075 = vmor %vm691, %vm1011
  %vm1076 = vmor %vm692, %vm1012
  %vm1077 = vmor %vm693, %vm1013
  %vm1078 = vmor %vm694, %vm1014
  %vm1079 = vmor %vm695, %vm1015
  %vm1080 = vmor %vm696, %vm1016
  %vm1081 = vmor %vm697, %vm1017
  %vm1082 = vmor %vm698, %vm1018
  %vm1083 = vmor %vm699, %vm1019
  %vm1084 = vmor %vm700, %vm1020
  %vm1085 = vmor %vm701, %vm1021
  %vm1086 = vmor %vm702, %vm1022
  %vm1087 = vmor %vm703, %vm1023
  %vm1088 = vmor %vm704, %vm1024
  %vm1089 = vmor %vm705, %vm1025
  %vm1090 = vmor %vm706, %vm1026
  %vm1091 = vmor %vm707, %vm1027
  %vm1092 = vmor %vm708, %vm1028
  %vm1093 = vmor %vm709, %vm1029
  %vm1094 = vmor %vm710, %vm1030
  %vm1095 = vmor %vm711, %vm1031
  %vm1096 = vmor %vm712, %vm1032
  %vm1097 = vmor %vm713, %vm1033
  %vm1098 = vmor %vm714, %vm1034
  %vm1099 = vmor %vm715, %vm1035
  %vm1100 = vmor %vm716, %vm1036
  %v1101 = vsel %vm1037, 1, 0
  %v1102 = vsel %vm1038, 1, 0
  %v1103 = vsel %vm1039, 1, 0
  %v1104 = vsel %vm1040, 1, 0
  %v1105 = vsel %vm1041, 1, 0
  %v1106 = vsel %vm1042, 1, 0
  %v1107 = vsel %vm1043, 1, 0
  %v1108 = vsel %vm1044, 1, 0
  %v1109 = vsel %vm1045, 1, 0
  %v1110 = vsel %vm1046, 1, 0
  %v1111 = vsel %vm1047, 1, 0
  %v1112 = vsel %vm1048, 1, 0
  %v1113 = vsel %vm1049, 1, 0
  %v1114 = vsel %vm1050, 1, 0
  %v1115 = vsel %vm1051, 1, 0
  %v1116 = vsel %vm1052, 1, 0
  %v1117 = vsel %vm1053, 1, 0
  %v1118 = vsel %vm1054, 1, 0
  %v1119 = vsel %vm1055, 1, 0
  %v1120 = vsel %vm1056, 1, 0
  %v1121 = vsel %vm1057, 1, 0
  %v1122 = vsel %vm1058, 1, 0
  %v1123 = vsel %vm1059, 1, 0
  %v1124 = vsel %vm1060, 1, 0
  %v1125 = vsel %vm1061, 1, 0
  %v1126 = vsel %vm1062, 1, 0
  %v1127 = vsel %vm1063, 1, 0
  %v1128 = vsel %vm1064, 1, 0
  %v1129 = vsel %vm1065, 1, 0
  %v1130 = vsel %vm1066, 1, 0
  %v1131 = vsel %vm1067, 1, 0
  %v1132 = vsel %vm1068, 1, 0
  %v1133 = vsel %vm1069, 1, 0
  %v1134 = vsel %vm1070, 1, 0
  %v1135 = vsel %vm1071, 1, 0
  %v1136 = vsel %vm1072, 1, 0
  %v1137 = vsel %vm1073, 1, 0
  %v1138 = vsel %vm1074, 1, 0
  %v1139 = vsel %vm1075, 1, 0
  %v1140 = vsel %vm1076, 1, 0
  %v1141 = vsel %vm1077, 1, 0
  %v1142 = vsel %vm1078, 1, 0
  %v1143 = vsel %vm1079, 1, 0
  %v1144 = vsel %vm1080, 1, 0
  %v1145 = vsel %vm1081, 1, 0
  %v1146 = vsel %vm1082, 1, 0
  %v1147 = vsel %vm1083, 1, 0
  %v1148 = vsel %vm1084, 1, 0
  %v1149 = vsel %vm1085, 1, 0
  %v1150 = vsel %vm1086, 1, 0
  %v1151 = vsel %vm1087, 1, 0
  %v1152 = vsel %vm1088, 1, 0
  %v1153 = vsel %vm1089, 1, 0
  %v1154 = vsel %vm1090, 1, 0
  %v1155 = vsel %vm1091, 1, 0
  %v1156 = vsel %vm1092, 1, 0
  %v1157 = vsel %vm1093, 1, 0
  %v1158 = vsel %vm1094, 1, 0
  %v1159 = vsel %vm1095, 1, 0
  %v1160 = vsel %vm1096, 1, 0
  %v1161 = vsel %vm1097, 1, 0
  %v1162 = vsel %vm1098, 1, 0
  %v1163 = vsel %vm1099, 1, 0
  %v1164 = vsel %vm1100, 1, 0
  %v1165 = vcvt.s32.f32 %v1101
  %v1166 = vcvt.s32.f32 %v1102
  %v1167 = vcvt.s32.f32 %v1103
  %v1168 = vcvt.s32.f32 %v1104
  %v1169 = vcvt.s32.f32 %v1105
  %v1170 = vcvt.s32.f32 %v1106
  %v1171 = vcvt.s32.f32 %v1107
  %v1172 = vcvt.s32.f32 %v1108
  %v1173 = vcvt.s32.f32 %v1109
  %v1174 = vcvt.s32.f32 %v1110
  %v1175 = vcvt.s32.f32 %v1111
  %v1176 = vcvt.s32.f32 %v1112
  %v1177 = vcvt.s32.f32 %v1113
  %v1178 = vcvt.s32.f32 %v1114
  %v1179 = vcvt.s32.f32 %v1115
  %v1180 = vcvt.s32.f32 %v1116
  %v1181 = vcvt.s32.f32 %v1117
  %v1182 = vcvt.s32.f32 %v1118
  %v1183 = vcvt.s32.f32 %v1119
  %v1184 = vcvt.s32.f32 %v1120
  %v1185 = vcvt.s32.f32 %v1121
  %v1186 = vcvt.s32.f32 %v1122
  %v1187 = vcvt.s32.f32 %v1123
  %v1188 = vcvt.s32.f32 %v1124
  %v1189 = vcvt.s32.f32 %v1125
  %v1190 = vcvt.s32.f32 %v1126
  %v1191 = vcvt.s32.f32 %v1127
  %v1192 = vcvt.s32.f32 %v1128
  %v1193 = vcvt.s32.f32 %v1129
  %v1194 = vcvt.s32.f32 %v1130
  %v1195 = vcvt.s32.f32 %v1131
  %v1196 = vcvt.s32.f32 %v1132
  %v1197 = vcvt.s32.f32 %v1133
  %v1198 = vcvt.s32.f32 %v1134
  %v1199 = vcvt.s32.f32 %v1135
  %v1200 = vcvt.s32.f32 %v1136
  %v1201 = vcvt.s32.f32 %v1137
  %v1202 = vcvt.s32.f32 %v1138
  %v1203 = vcvt.s32.f32 %v1139
  %v1204 = vcvt.s32.f32 %v1140
  %v1205 = vcvt.s32.f32 %v1141
  %v1206 = vcvt.s32.f32 %v1142
  %v1207 = vcvt.s32.f32 %v1143
  %v1208 = vcvt.s32.f32 %v1144
  %v1209 = vcvt.s32.f32 %v1145
  %v1210 = vcvt.s32.f32 %v1146
  %v1211 = vcvt.s32.f32 %v1147
  %v1212 = vcvt.s32.f32 %v1148
  %v1213 = vcvt.s32.f32 %v1149
  %v1214 = vcvt.s32.f32 %v1150
  %v1215 = vcvt.s32.f32 %v1151
  %v1216 = vcvt.s32.f32 %v1152
  %v1217 = vcvt.s32.f32 %v1153
  %v1218 = vcvt.s32.f32 %v1154
  %v1219 = vcvt.s32.f32 %v1155
  %v1220 = vcvt.s32.f32 %v1156
  %v1221 = vcvt.s32.f32 %v1157
  %v1222 = vcvt.s32.f32 %v1158
  %v1223 = vcvt.s32.f32 %v1159
  %v1224 = vcvt.s32.f32 %v1160
  %v1225 = vcvt.s32.f32 %v1161
  %v1226 = vcvt.s32.f32 %v1162
  %v1227 = vcvt.s32.f32 %v1163
  %v1228 = vcvt.s32.f32 %v1164
  %v1229 = vld [vmem:[%s1] sm:$0xff]
  %v1230 = vld [vmem:[%s1 + $0x8] sm:$0xff]
  %vm1231 = vcmask 130048
  %v1233 = vsel %vm1231, %v1165, 0
  %v1236 = vsel %vm1231, %v1166, 0
  %v1239 = vsel %vm1231, %v1167, 0
  %v1242 = vsel %vm1231, %v1168, 0
  %v1245 = vsel %vm1231, %v1169, 0
  %v1248 = vsel %vm1231, %v1170, 0
  %v1251 = vsel %vm1231, %v1171, 0
  %v1254 = vsel %vm1231, %v1172, 0
  %v1257 = vsel %vm1231, %v1173, 0
  %v1260 = vsel %vm1231, %v1174, 0
  %v1263 = vsel %vm1231, %v1175, 0
  %v1266 = vsel %vm1231, %v1176, 0
  %v1269 = vsel %vm1231, %v1177, 0
  %v1272 = vsel %vm1231, %v1178, 0
  %v1275 = vsel %vm1231, %v1179, 0
  %v1278 = vsel %vm1231, %v1180, 0
  %v1281 = vsel %vm1231, %v1181, 0
  %v1284 = vsel %vm1231, %v1182, 0
  %v1287 = vsel %vm1231, %v1183, 0
  %v1290 = vsel %vm1231, %v1184, 0
  %v1293 = vsel %vm1231, %v1185, 0
  %v1296 = vsel %vm1231, %v1186, 0
  %v1299 = vsel %vm1231, %v1187, 0
  %v1302 = vsel %vm1231, %v1188, 0
  %v1305 = vsel %vm1231, %v1189, 0
  %v1308 = vsel %vm1231, %v1190, 0
  %v1311 = vsel %vm1231, %v1191, 0
  %v1314 = vsel %vm1231, %v1192, 0
  %v1317 = vsel %vm1231, %v1193, 0
  %v1320 = vsel %vm1231, %v1194, 0
  %v1323 = vsel %vm1231, %v1195, 0
  %v1326 = vsel %vm1231, %v1196, 0
  %v1329 = vsel %vm1231, %v1197, 0
  %v1332 = vsel %vm1231, %v1198, 0
  %v1335 = vsel %vm1231, %v1199, 0
  %v1338 = vsel %vm1231, %v1200, 0
  %v1341 = vsel %vm1231, %v1201, 0
  %v1344 = vsel %vm1231, %v1202, 0
  %v1347 = vsel %vm1231, %v1203, 0
  %v1350 = vsel %vm1231, %v1204, 0
  %v1353 = vsel %vm1231, %v1205, 0
  %v1356 = vsel %vm1231, %v1206, 0
  %v1359 = vsel %vm1231, %v1207, 0
  %v1362 = vsel %vm1231, %v1208, 0
  %v1365 = vsel %vm1231, %v1209, 0
  %v1368 = vsel %vm1231, %v1210, 0
  %v1371 = vsel %vm1231, %v1211, 0
  %v1374 = vsel %vm1231, %v1212, 0
  %v1377 = vsel %vm1231, %v1213, 0
  %v1380 = vsel %vm1231, %v1214, 0
  %v1383 = vsel %vm1231, %v1215, 0
  %v1386 = vsel %vm1231, %v1216, 0
  %v1389 = vsel %vm1231, %v1217, 0
  %v1392 = vsel %vm1231, %v1218, 0
  %v1395 = vsel %vm1231, %v1219, 0
  %v1398 = vsel %vm1231, %v1220, 0
  %v1401 = vsel %vm1231, %v1221, 0
  %v1404 = vsel %vm1231, %v1222, 0
  %v1407 = vsel %vm1231, %v1223, 0
  %v1410 = vsel %vm1231, %v1224, 0
  %v1413 = vsel %vm1231, %v1225, 0
  %v1416 = vsel %vm1231, %v1226, 0
  %v1419 = vsel %vm1231, %v1227, 0
  %v1422 = vsel %vm1231, %v1228, 0
  %1424 = vmatprep.subr.mxu0 0.0
  %1425 = vmatpush1.msra.mxu0 %v1229
  %1426 = vmatprep.subr.mxu0 0.0
  %1427 = vmatpush1.msra.mxu0 %v1230
  %1428 = vmatprep.subr.mxu0 0.0
  %1429 = vmatpush1.msra.mxu0 0.0
  %1430 = vmatprep.subr.mxu0 0.0
  %1431 = vmatpush1.msra.mxu0 0.0
  %1432 = vmatprep.subr.mxu0 0.0
  %1433 = vmatpush1.msra.mxu0 0.0
  %1434 = vmatprep.subr.mxu0 0.0
  %1435 = vmatpush1.msra.mxu0 0.0
  %1436 = vmatprep.subr.mxu0 0.0
  %1437 = vmatpush1.msra.mxu0 0.0
  %1438 = vmatprep.subr.mxu0 0.0
  %1439 = vmatpush1.msra.mxu0 0.0
  %1440 = vmatprep.subr.mxu0 0.0
  %1441 = vmatpush1.msra.mxu0 0.0
  %1442 = vmatprep.subr.mxu0 0.0
  %1443 = vmatpush1.msra.mxu0 0.0
  %1444 = vmatprep.subr.mxu0 0.0
  %1445 = vmatpush1.msra.mxu0 0.0
  %1446 = vmatprep.subr.mxu0 0.0
  %1447 = vmatpush1.msra.mxu0 0.0
  %1448 = vmatprep.subr.mxu0 0.0
  %1449 = vmatpush1.msra.mxu0 0.0
  %1450 = vmatprep.subr.mxu0 0.0
  %1451 = vmatpush1.msra.mxu0 0.0
  %1452 = vmatprep.subr.mxu0 0.0
  %1453 = vmatpush1.msra.mxu0 0.0
  %1454 = vmatprep.subr.mxu0 0.0
  %1455 = vmatpush1.msra.mxu0 0.0
  %1456 = vmatprep.subr.mxu0 0.0
  %1457 = vmatpush1.msra.mxu0 0.0
  %1458 = vmatprep.subr.mxu0 0.0
  %1459 = vmatpush1.msra.mxu0 0.0
  %1460 = vmatprep.subr.mxu0 0.0
  %1461 = vmatpush1.msra.mxu0 0.0
  %1462 = vmatprep.subr.mxu0 0.0
  %1463 = vmatpush1.msra.mxu0 0.0
  %1464 = vmatprep.subr.mxu0 0.0
  %1465 = vmatpush1.msra.mxu0 0.0
  %1466 = vmatprep.subr.mxu0 0.0
  %1467 = vmatpush1.msra.mxu0 0.0
  %1468 = vmatprep.subr.mxu0 0.0
  %1469 = vmatpush1.msra.mxu0 0.0
  %1470 = vmatprep.subr.mxu0 0.0
  %1471 = vmatpush1.msra.mxu0 0.0
  %1472 = vmatprep.subr.mxu0 0.0
  %1473 = vmatpush1.msra.mxu0 0.0
  %1474 = vmatprep.subr.mxu0 0.0
  %1475 = vmatpush1.msra.mxu0 0.0
  %1476 = vmatprep.subr.mxu0 0.0
  %1477 = vmatpush1.msra.mxu0 0.0
  %1478 = vmatprep.subr.mxu0 0.0
  %1479 = vmatpush1.msra.mxu0 0.0
  %1480 = vmatprep.subr.mxu0 0.0
  %1481 = vmatpush1.msra.mxu0 0.0
  %1482 = vmatprep.subr.mxu0 0.0
  %1483 = vmatpush1.msra.mxu0 0.0
  %1484 = vmatprep.subr.mxu0 0.0
  %1485 = vmatpush1.msra.mxu0 0.0
  %1486 = vmatprep.subr.mxu0 0.0
  %1487 = vmatpush1.msra.mxu0 0.0
  %1488 = vmatprep.mubr.f32.mxu0 0.0
  %1489 = vmatmul.mubr.f32.gmra.mrb[0].mxu0 %v1233
  %v1490 = vpop.f32.mrb[0].mxu0
  %v1491 = vadd.f32 0.0, %v1490
  %v1492 = vpop.f32.mrb[0].mxu0
  %1493 = vmatprep.mubr.f32.mxu0 0.0
  %1494 = vmatmul.mubr.f32.gmra.mrb[0].mxu0 %v1236
  %v1495 = vpop.f32.mrb[0].mxu0
  %v1496 = vadd.f32 0.0, %v1495
  %v1497 = vpop.f32.mrb[0].mxu0
  %1498 = vmatprep.mubr.f32.mxu0 0.0
  %1499 = vmatmul.mubr.f32.gmra.mrb[0].mxu0 %v1239
  %v1500 = vpop.f32.mrb[0].mxu0
  %v1501 = vadd.f32 0.0, %v1500
  %v1502 = vpop.f32.mrb[0].mxu0
  %1503 = vmatprep.mubr.f32.mxu0 0.0
  %1504 = vmatmul.mubr.f32.gmra.mrb[0].mxu0 %v1242
  %v1505 = vpop.f32.mrb[0].mxu0
  %v1506 = vadd.f32 0.0, %v1505
  %v1507 = vpop.f32.mrb[0].mxu0
  %1508 = vmatprep.mubr.f32.mxu0 0.0
  %1509 = vmatmul.mubr.f32.gmra.mrb[0].mxu0 %v1245
  %v1510 = vpop.f32.mrb[0].mxu0
  %v1511 = vadd.f32 0.0, %v1510
  %v1512 = vpop.f32.mrb[0].mxu0
  %1513 = vmatprep.mubr.f32.mxu0 0.0
  %1514 = vmatmul.mubr.f32.gmra.mrb[0].mxu0 %v1248
  %v1515 = vpop.f32.mrb[0].mxu0
  %v1516 = vadd.f32 0.0, %v1515
  %v1517 = vpop.f32.mrb[0].mxu0
  %1518 = vmatprep.mubr.f32.mxu0 0.0
  %1519 = vmatmul.mubr.f32.gmra.mrb[0].mxu0 %v1251
  %v1520 = vpop.f32.mrb[0].mxu0
  %v1521 = vadd.f32 0.0, %v1520
  %v1522 = vpop.f32.mrb[0].mxu0
  %1523 = vmatprep.mubr.f32.mxu0 0.0
  %1524 = vmatmul.mubr.f32.gmra.mrb[0].mxu0 %v1254
  %v1525 = vpop.f32.mrb[0].mxu0
  %v1526 = vadd.f32 0.0, %v1525
  %v1527 = vpop.f32.mrb[0].mxu0
  %1528 = vmatprep.mubr.f32.mxu0 0.0
  %1529 = vmatmul.mubr.f32.gmra.mrb[0].mxu0 %v1257
  %v1530 = vpop.f32.mrb[0].mxu0
  %v1531 = vadd.f32 0.0, %v1530
  %v1532 = vpop.f32.mrb[0].mxu0
  %1533 = vmatprep.mubr.f32.mxu0 0.0
  %1534 = vmatmul.mubr.f32.gmra.mrb[0].mxu0 %v1260
  %v1535 = vpop.f32.mrb[0].mxu0
  %v1536 = vadd.f32 0.0, %v1535
  %v1537 = vpop.f32.mrb[0].mxu0
  %1538 = vmatprep.mubr.f32.mxu0 0.0
  %1539 = vmatmul.mubr.f32.gmra.mrb[0].mxu0 %v1263
  %v1540 = vpop.f32.mrb[0].mxu0
  %v1541 = vadd.f32 0.0, %v1540
  %v1542 = vpop.f32.mrb[0].mxu0
  %1543 = vmatprep.mubr.f32.mxu0 0.0
  %1544 = vmatmul.mubr.f32.gmra.mrb[0].mxu0 %v1266
  %v1545 = vpop.f32.mrb[0].mxu0
  %v1546 = vadd.f32 0.0, %v1545
  %v1547 = vpop.f32.mrb[0].mxu0
  %1548 = vmatprep.mubr.f32.mxu0 0.0
  %1549 = vmatmul.mubr.f32.gmra.mrb[0].mxu0 %v1269
  %v1550 = vpop.f32.mrb[0].mxu0
  %v1551 = vadd.f32 0.0, %v1550
  %v1552 = vpop.f32.mrb[0].mxu0
  %1553 = vmatprep.mubr.f32.mxu0 0.0
  %1554 = vmatmul.mubr.f32.gmra.mrb[0].mxu0 %v1272
  %v1555 = vpop.f32.mrb[0].mxu0
  %v1556 = vadd.f32 0.0, %v1555
  %v1557 = vpop.f32.mrb[0].mxu0
  %1558 = vmatprep.mubr.f32.mxu0 0.0
  %1559 = vmatmul.mubr.f32.gmra.mrb[0].mxu0 %v1275
  %v1560 = vpop.f32.mrb[0].mxu0
  %v1561 = vadd.f32 0.0, %v1560
  %v1562 = vpop.f32.mrb[0].mxu0
  %1563 = vmatprep.mubr.f32.mxu0 0.0
  %1564 = vmatmul.mubr.f32.gmra.mrb[0].mxu0 %v1278
  %v1565 = vpop.f32.mrb[0].mxu0
  %v1566 = vadd.f32 0.0, %v1565
  %v1567 = vpop.f32.mrb[0].mxu0
  %1568 = vmatprep.mubr.f32.mxu0 0.0
  %1569 = vmatmul.mubr.f32.gmra.mrb[0].mxu0 %v1281
  %v1570 = vpop.f32.mrb[0].mxu0
  %v1571 = vadd.f32 0.0, %v1570
  %v1572 = vpop.f32.mrb[0].mxu0
  %1573 = vmatprep.mubr.f32.mxu0 0.0
  %1574 = vmatmul.mubr.f32.gmra.mrb[0].mxu0 %v1284
  %v1575 = vpop.f32.mrb[0].mxu0
  %v1576 = vadd.f32 0.0, %v1575
  %v1577 = vpop.f32.mrb[0].mxu0
  %1578 = vmatprep.mubr.f32.mxu0 0.0
  %1579 = vmatmul.mubr.f32.gmra.mrb[0].mxu0 %v1287
  %v1580 = vpop.f32.mrb[0].mxu0
  %v1581 = vadd.f32 0.0, %v1580
  %v1582 = vpop.f32.mrb[0].mxu0
  %1583 = vmatprep.mubr.f32.mxu0 0.0
  %1584 = vmatmul.mubr.f32.gmra.mrb[0].mxu0 %v1290
  %v1585 = vpop.f32.mrb[0].mxu0
  %v1586 = vadd.f32 0.0, %v1585
  %v1587 = vpop.f32.mrb[0].mxu0
  %1588 = vmatprep.mubr.f32.mxu0 0.0
  %1589 = vmatmul.mubr.f32.gmra.mrb[0].mxu0 %v1293
  %v1590 = vpop.f32.mrb[0].mxu0
  %v1591 = vadd.f32 0.0, %v1590
  %v1592 = vpop.f32.mrb[0].mxu0
  %1593 = vmatprep.mubr.f32.mxu0 0.0
  %1594 = vmatmul.mubr.f32.gmra.mrb[0].mxu0 %v1296
  %v1595 = vpop.f32.mrb[0].mxu0
  %v1596 = vadd.f32 0.0, %v1595
  %v1597 = vpop.f32.mrb[0].mxu0
  %1598 = vmatprep.mubr.f32.mxu0 0.0
  %1599 = vmatmul.mubr.f32.gmra.mrb[0].mxu0 %v1299
  %v1600 = vpop.f32.mrb[0].mxu0
  %v1601 = vadd.f32 0.0, %v1600
  %v1602 = vpop.f32.mrb[0].mxu0
  %1603 = vmatprep.mubr.f32.mxu0 0.0
  %1604 = vmatmul.mubr.f32.gmra.mrb[0].mxu0 %v1302
  %v1605 = vpop.f32.mrb[0].mxu0
  %v1606 = vadd.f32 0.0, %v1605
  %v1607 = vpop.f32.mrb[0].mxu0
  %1608 = vmatprep.mubr.f32.mxu0 0.0
  %1609 = vmatmul.mubr.f32.gmra.mrb[0].mxu0 %v1305
  %v1610 = vpop.f32.mrb[0].mxu0
  %v1611 = vadd.f32 0.0, %v1610
  %v1612 = vpop.f32.mrb[0].mxu0
  %1613 = vmatprep.mubr.f32.mxu0 0.0
  %1614 = vmatmul.mubr.f32.gmra.mrb[0].mxu0 %v1308
  %v1615 = vpop.f32.mrb[0].mxu0
  %v1616 = vadd.f32 0.0, %v1615
  %v1617 = vpop.f32.mrb[0].mxu0
  %1618 = vmatprep.mubr.f32.mxu0 0.0
  %1619 = vmatmul.mubr.f32.gmra.mrb[0].mxu0 %v1311
  %v1620 = vpop.f32.mrb[0].mxu0
  %v1621 = vadd.f32 0.0, %v1620
  %v1622 = vpop.f32.mrb[0].mxu0
  %1623 = vmatprep.mubr.f32.mxu0 0.0
  %1624 = vmatmul.mubr.f32.gmra.mrb[0].mxu0 %v1314
  %v1625 = vpop.f32.mrb[0].mxu0
  %v1626 = vadd.f32 0.0, %v1625
  %v1627 = vpop.f32.mrb[0].mxu0
  %1628 = vmatprep.mubr.f32.mxu0 0.0
  %1629 = vmatmul.mubr.f32.gmra.mrb[0].mxu0 %v1317
  %v1630 = vpop.f32.mrb[0].mxu0
  %v1631 = vadd.f32 0.0, %v1630
  %v1632 = vpop.f32.mrb[0].mxu0
  %1633 = vmatprep.mubr.f32.mxu0 0.0
  %1634 = vmatmul.mubr.f32.gmra.mrb[0].mxu0 %v1320
  %v1635 = vpop.f32.mrb[0].mxu0
  %v1636 = vadd.f32 0.0, %v1635
  %v1637 = vpop.f32.mrb[0].mxu0
  %1638 = vmatprep.mubr.f32.mxu0 0.0
  %1639 = vmatmul.mubr.f32.gmra.mrb[0].mxu0 %v1323
  %v1640 = vpop.f32.mrb[0].mxu0
  %v1641 = vadd.f32 0.0, %v1640
  %v1642 = vpop.f32.mrb[0].mxu0
  %1643 = vmatprep.mubr.f32.mxu0 0.0
  %1644 = vmatmul.mubr.f32.gmra.mrb[0].mxu0 %v1326
  %v1645 = vpop.f32.mrb[0].mxu0
  %v1646 = vadd.f32 0.0, %v1645
  %v1647 = vpop.f32.mrb[0].mxu0
  %1648 = vmatprep.mubr.f32.mxu0 0.0
  %1649 = vmatmul.mubr.f32.gmra.mrb[0].mxu0 %v1329
  %v1650 = vpop.f32.mrb[0].mxu0
  %v1651 = vadd.f32 0.0, %v1650
  %v1652 = vpop.f32.mrb[0].mxu0
  %1653 = vmatprep.mubr.f32.mxu0 0.0
  %1654 = vmatmul.mubr.f32.gmra.mrb[0].mxu0 %v1332
  %v1655 = vpop.f32.mrb[0].mxu0
  %v1656 = vadd.f32 0.0, %v1655
  %v1657 = vpop.f32.mrb[0].mxu0
  %1658 = vmatprep.mubr.f32.mxu0 0.0
  %1659 = vmatmul.mubr.f32.gmra.mrb[0].mxu0 %v1335
  %v1660 = vpop.f32.mrb[0].mxu0
  %v1661 = vadd.f32 0.0, %v1660
  %v1662 = vpop.f32.mrb[0].mxu0
  %1663 = vmatprep.mubr.f32.mxu0 0.0
  %1664 = vmatmul.mubr.f32.gmra.mrb[0].mxu0 %v1338
  %v1665 = vpop.f32.mrb[0].mxu0
  %v1666 = vadd.f32 0.0, %v1665
  %v1667 = vpop.f32.mrb[0].mxu0
  %1668 = vmatprep.mubr.f32.mxu0 0.0
  %1669 = vmatmul.mubr.f32.gmra.mrb[0].mxu0 %v1341
  %v1670 = vpop.f32.mrb[0].mxu0
  %v1671 = vadd.f32 0.0, %v1670
  %v1672 = vpop.f32.mrb[0].mxu0
  %1673 = vmatprep.mubr.f32.mxu0 0.0
  %1674 = vmatmul.mubr.f32.gmra.mrb[0].mxu0 %v1344
  %v1675 = vpop.f32.mrb[0].mxu0
  %v1676 = vadd.f32 0.0, %v1675
  %v1677 = vpop.f32.mrb[0].mxu0
  %1678 = vmatprep.mubr.f32.mxu0 0.0
  %1679 = vmatmul.mubr.f32.gmra.mrb[0].mxu0 %v1347
  %v1680 = vpop.f32.mrb[0].mxu0
  %v1681 = vadd.f32 0.0, %v1680
  %v1682 = vpop.f32.mrb[0].mxu0
  %1683 = vmatprep.mubr.f32.mxu0 0.0
  %1684 = vmatmul.mubr.f32.gmra.mrb[0].mxu0 %v1350
  %v1685 = vpop.f32.mrb[0].mxu0
  %v1686 = vadd.f32 0.0, %v1685
  %v1687 = vpop.f32.mrb[0].mxu0
  %1688 = vmatprep.mubr.f32.mxu0 0.0
  %1689 = vmatmul.mubr.f32.gmra.mrb[0].mxu0 %v1353
  %v1690 = vpop.f32.mrb[0].mxu0
  %v1691 = vadd.f32 0.0, %v1690
  %v1692 = vpop.f32.mrb[0].mxu0
  %1693 = vmatprep.mubr.f32.mxu0 0.0
  %1694 = vmatmul.mubr.f32.gmra.mrb[0].mxu0 %v1356
  %v1695 = vpop.f32.mrb[0].mxu0
  %v1696 = vadd.f32 0.0, %v1695
  %v1697 = vpop.f32.mrb[0].mxu0
  %1698 = vmatprep.mubr.f32.mxu0 0.0
  %1699 = vmatmul.mubr.f32.gmra.mrb[0].mxu0 %v1359
  %v1700 = vpop.f32.mrb[0].mxu0
  %v1701 = vadd.f32 0.0, %v1700
  %v1702 = vpop.f32.mrb[0].mxu0
  %1703 = vmatprep.mubr.f32.mxu0 0.0
  %1704 = vmatmul.mubr.f32.gmra.mrb[0].mxu0 %v1362
  %v1705 = vpop.f32.mrb[0].mxu0
  %v1706 = vadd.f32 0.0, %v1705
  %v1707 = vpop.f32.mrb[0].mxu0
  %1708 = vmatprep.mubr.f32.mxu0 0.0
  %1709 = vmatmul.mubr.f32.gmra.mrb[0].mxu0 %v1365
  %v1710 = vpop.f32.mrb[0].mxu0
  %v1711 = vadd.f32 0.0, %v1710
  %v1712 = vpop.f32.mrb[0].mxu0
  %1713 = vmatprep.mubr.f32.mxu0 0.0
  %1714 = vmatmul.mubr.f32.gmra.mrb[0].mxu0 %v1368
  %v1715 = vpop.f32.mrb[0].mxu0
  %v1716 = vadd.f32 0.0, %v1715
  %v1717 = vpop.f32.mrb[0].mxu0
  %1718 = vmatprep.mubr.f32.mxu0 0.0
  %1719 = vmatmul.mubr.f32.gmra.mrb[0].mxu0 %v1371
  %v1720 = vpop.f32.mrb[0].mxu0
  %v1721 = vadd.f32 0.0, %v1720
  %v1722 = vpop.f32.mrb[0].mxu0
  %1723 = vmatprep.mubr.f32.mxu0 0.0
  %1724 = vmatmul.mubr.f32.gmra.mrb[0].mxu0 %v1374
  %v1725 = vpop.f32.mrb[0].mxu0
  %v1726 = vadd.f32 0.0, %v1725
  %v1727 = vpop.f32.mrb[0].mxu0
  %1728 = vmatprep.mubr.f32.mxu0 0.0
  %1729 = vmatmul.mubr.f32.gmra.mrb[0].mxu0 %v1377
  %v1730 = vpop.f32.mrb[0].mxu0
  %v1731 = vadd.f32 0.0, %v1730
  %v1732 = vpop.f32.mrb[0].mxu0
  %1733 = vmatprep.mubr.f32.mxu0 0.0
  %1734 = vmatmul.mubr.f32.gmra.mrb[0].mxu0 %v1380
  %v1735 = vpop.f32.mrb[0].mxu0
  %v1736 = vadd.f32 0.0, %v1735
  %v1737 = vpop.f32.mrb[0].mxu0
  %1738 = vmatprep.mubr.f32.mxu0 0.0
  %1739 = vmatmul.mubr.f32.gmra.mrb[0].mxu0 %v1383
  %v1740 = vpop.f32.mrb[0].mxu0
  %v1741 = vadd.f32 0.0, %v1740
  %v1742 = vpop.f32.mrb[0].mxu0
  %1743 = vmatprep.mubr.f32.mxu0 0.0
  %1744 = vmatmul.mubr.f32.gmra.mrb[0].mxu0 %v1386
  %v1745 = vpop.f32.mrb[0].mxu0
  %v1746 = vadd.f32 0.0, %v1745
  %v1747 = vpop.f32.mrb[0].mxu0
  %1748 = vmatprep.mubr.f32.mxu0 0.0
  %1749 = vmatmul.mubr.f32.gmra.mrb[0].mxu0 %v1389
  %v1750 = vpop.f32.mrb[0].mxu0
  %v1751 = vadd.f32 0.0, %v1750
  %v1752 = vpop.f32.mrb[0].mxu0
  %1753 = vmatprep.mubr.f32.mxu0 0.0
  %1754 = vmatmul.mubr.f32.gmra.mrb[0].mxu0 %v1392
  %v1755 = vpop.f32.mrb[0].mxu0
  %v1756 = vadd.f32 0.0, %v1755
  %v1757 = vpop.f32.mrb[0].mxu0
  %1758 = vmatprep.mubr.f32.mxu0 0.0
  %1759 = vmatmul.mubr.f32.gmra.mrb[0].mxu0 %v1395
  %v1760 = vpop.f32.mrb[0].mxu0
  %v1761 = vadd.f32 0.0, %v1760
  %v1762 = vpop.f32.mrb[0].mxu0
  %1763 = vmatprep.mubr.f32.mxu0 0.0
  %1764 = vmatmul.mubr.f32.gmra.mrb[0].mxu0 %v1398
  %v1765 = vpop.f32.mrb[0].mxu0
  %v1766 = vadd.f32 0.0, %v1765
  %v1767 = vpop.f32.mrb[0].mxu0
  %1768 = vmatprep.mubr.f32.mxu0 0.0
  %1769 = vmatmul.mubr.f32.gmra.mrb[0].mxu0 %v1401
  %v1770 = vpop.f32.mrb[0].mxu0
  %v1771 = vadd.f32 0.0, %v1770
  %v1772 = vpop.f32.mrb[0].mxu0
  %1773 = vmatprep.mubr.f32.mxu0 0.0
  %1774 = vmatmul.mubr.f32.gmra.mrb[0].mxu0 %v1404
  %v1775 = vpop.f32.mrb[0].mxu0
  %v1776 = vadd.f32 0.0, %v1775
  %v1777 = vpop.f32.mrb[0].mxu0
  %1778 = vmatprep.mubr.f32.mxu0 0.0
  %1779 = vmatmul.mubr.f32.gmra.mrb[0].mxu0 %v1407
  %v1780 = vpop.f32.mrb[0].mxu0
  %v1781 = vadd.f32 0.0, %v1780
  %v1782 = vpop.f32.mrb[0].mxu0
  %1783 = vmatprep.mubr.f32.mxu0 0.0
  %1784 = vmatmul.mubr.f32.gmra.mrb[0].mxu0 %v1410
  %v1785 = vpop.f32.mrb[0].mxu0
  %v1786 = vadd.f32 0.0, %v1785
  %v1787 = vpop.f32.mrb[0].mxu0
  %1788 = vmatprep.mubr.f32.mxu0 0.0
  %1789 = vmatmul.mubr.f32.gmra.mrb[0].mxu0 %v1413
  %v1790 = vpop.f32.mrb[0].mxu0
  %v1791 = vadd.f32 0.0, %v1790
  %v1792 = vpop.f32.mrb[0].mxu0
  %1793 = vmatprep.mubr.f32.mxu0 0.0
  %1794 = vmatmul.mubr.f32.gmra.mrb[0].mxu0 %v1416
  %v1795 = vpop.f32.mrb[0].mxu0
  %v1796 = vadd.f32 0.0, %v1795
  %v1797 = vpop.f32.mrb[0].mxu0
  %1798 = vmatprep.mubr.f32.mxu0 0.0
  %1799 = vmatmul.mubr.f32.gmra.mrb[0].mxu0 %v1419
  %v1800 = vpop.f32.mrb[0].mxu0
  %v1801 = vadd.f32 0.0, %v1800
  %v1802 = vpop.f32.mrb[0].mxu0
  %1803 = vmatprep.mubr.f32.mxu0 0.0
  %1804 = vmatmul.mubr.f32.gmra.mrb[0].mxu0 %v1422
  %v1805 = vpop.f32.mrb[0].mxu0
  %v1806 = vadd.f32 0.0, %v1805
  %v1807 = vpop.f32.mrb[0].mxu0
  %1808 = vdwg.mxu0
  %vm1809 = vcmask 261120
  %1810 = vst.msk [vmem:[%s2] sm:$0xff] %vm1809, %v1491
  %1811 = vst.msk [vmem:[%s2 + $0x8] sm:$0xff] %vm1809, %v1496
  %1812 = vst.msk [vmem:[%s2 + $0x10] sm:$0xff] %vm1809, %v1501
  %1813 = vst.msk [vmem:[%s2 + $0x18] sm:$0xff] %vm1809, %v1506
  %1814 = vst.msk [vmem:[%s2 + $0x20] sm:$0xff] %vm1809, %v1511
  %1815 = vst.msk [vmem:[%s2 + $0x28] sm:$0xff] %vm1809, %v1516
  %1816 = vst.msk [vmem:[%s2 + $0x30] sm:$0xff] %vm1809, %v1521
  %1817 = vst.msk [vmem:[%s2 + $0x38] sm:$0xff] %vm1809, %v1526
  %1818 = vst.msk [vmem:[%s2 + $0x40] sm:$0xff] %vm1809, %v1531
  %1819 = vst.msk [vmem:[%s2 + $0x48] sm:$0xff] %vm1809, %v1536
  %1820 = vst.msk [vmem:[%s2 + $0x50] sm:$0xff] %vm1809, %v1541
  %1821 = vst.msk [vmem:[%s2 + $0x58] sm:$0xff] %vm1809, %v1546
  %1822 = vst.msk [vmem:[%s2 + $0x60] sm:$0xff] %vm1809, %v1551
  %1823 = vst.msk [vmem:[%s2 + $0x68] sm:$0xff] %vm1809, %v1556
  %1824 = vst.msk [vmem:[%s2 + $0x70] sm:$0xff] %vm1809, %v1561
  %1825 = vst.msk [vmem:[%s2 + $0x78] sm:$0xff] %vm1809, %v1566
  %1826 = vst.msk [vmem:[%s2 + $0x80] sm:$0xff] %vm1809, %v1571
  %1827 = vst.msk [vmem:[%s2 + $0x88] sm:$0xff] %vm1809, %v1576
  %1828 = vst.msk [vmem:[%s2 + $0x90] sm:$0xff] %vm1809, %v1581
  %1829 = vst.msk [vmem:[%s2 + $0x98] sm:$0xff] %vm1809, %v1586
  %1830 = vst.msk [vmem:[%s2 + $0xa0] sm:$0xff] %vm1809, %v1591
  %1831 = vst.msk [vmem:[%s2 + $0xa8] sm:$0xff] %vm1809, %v1596
  %1832 = vst.msk [vmem:[%s2 + $0xb0] sm:$0xff] %vm1809, %v1601
  %1833 = vst.msk [vmem:[%s2 + $0xb8] sm:$0xff] %vm1809, %v1606
  %1834 = vst.msk [vmem:[%s2 + $0xc0] sm:$0xff] %vm1809, %v1611
  %1835 = vst.msk [vmem:[%s2 + $0xc8] sm:$0xff] %vm1809, %v1616
  %1836 = vst.msk [vmem:[%s2 + $0xd0] sm:$0xff] %vm1809, %v1621
  %1837 = vst.msk [vmem:[%s2 + $0xd8] sm:$0xff] %vm1809, %v1626
  %1838 = vst.msk [vmem:[%s2 + $0xe0] sm:$0xff] %vm1809, %v1631
  %1839 = vst.msk [vmem:[%s2 + $0xe8] sm:$0xff] %vm1809, %v1636
  %1840 = vst.msk [vmem:[%s2 + $0xf0] sm:$0xff] %vm1809, %v1641
  %1841 = vst.msk [vmem:[%s2 + $0xf8] sm:$0xff] %vm1809, %v1646
  %1842 = vst.msk [vmem:[%s2 + $0x100] sm:$0xff] %vm1809, %v1651
  %1843 = vst.msk [vmem:[%s2 + $0x108] sm:$0xff] %vm1809, %v1656
  %1844 = vst.msk [vmem:[%s2 + $0x110] sm:$0xff] %vm1809, %v1661
  %1845 = vst.msk [vmem:[%s2 + $0x118] sm:$0xff] %vm1809, %v1666
  %1846 = vst.msk [vmem:[%s2 + $0x120] sm:$0xff] %vm1809, %v1671
  %1847 = vst.msk [vmem:[%s2 + $0x128] sm:$0xff] %vm1809, %v1676
  %1848 = vst.msk [vmem:[%s2 + $0x130] sm:$0xff] %vm1809, %v1681
  %1849 = vst.msk [vmem:[%s2 + $0x138] sm:$0xff] %vm1809, %v1686
  %1850 = vst.msk [vmem:[%s2 + $0x140] sm:$0xff] %vm1809, %v1691
  %1851 = vst.msk [vmem:[%s2 + $0x148] sm:$0xff] %vm1809, %v1696
  %1852 = vst.msk [vmem:[%s2 + $0x150] sm:$0xff] %vm1809, %v1701
  %1853 = vst.msk [vmem:[%s2 + $0x158] sm:$0xff] %vm1809, %v1706
  %1854 = vst.msk [vmem:[%s2 + $0x160] sm:$0xff] %vm1809, %v1711
  %1855 = vst.msk [vmem:[%s2 + $0x168] sm:$0xff] %vm1809, %v1716
  %1856 = vst.msk [vmem:[%s2 + $0x170] sm:$0xff] %vm1809, %v1721
  %1857 = vst.msk [vmem:[%s2 + $0x178] sm:$0xff] %vm1809, %v1726
  %1858 = vst.msk [vmem:[%s2 + $0x180] sm:$0xff] %vm1809, %v1731
  %1859 = vst.msk [vmem:[%s2 + $0x188] sm:$0xff] %vm1809, %v1736
  %1860 = vst.msk [vmem:[%s2 + $0x190] sm:$0xff] %vm1809, %v1741
  %1861 = vst.msk [vmem:[%s2 + $0x198] sm:$0xff] %vm1809, %v1746
  %1862 = vst.msk [vmem:[%s2 + $0x1a0] sm:$0xff] %vm1809, %v1751
  %1863 = vst.msk [vmem:[%s2 + $0x1a8] sm:$0xff] %vm1809, %v1756
  %1864 = vst.msk [vmem:[%s2 + $0x1b0] sm:$0xff] %vm1809, %v1761
  %1865 = vst.msk [vmem:[%s2 + $0x1b8] sm:$0xff] %vm1809, %v1766
  %1866 = vst.msk [vmem:[%s2 + $0x1c0] sm:$0xff] %vm1809, %v1771
  %1867 = vst.msk [vmem:[%s2 + $0x1c8] sm:$0xff] %vm1809, %v1776
  %1868 = vst.msk [vmem:[%s2 + $0x1d0] sm:$0xff] %vm1809, %v1781
  %1869 = vst.msk [vmem:[%s2 + $0x1d8] sm:$0xff] %vm1809, %v1786
  %1870 = vst.msk [vmem:[%s2 + $0x1e0] sm:$0xff] %vm1809, %v1791
  %1871 = vst.msk [vmem:[%s2 + $0x1e8] sm:$0xff] %vm1809, %v1796
  %1872 = vst.msk [vmem:[%s2 + $0x1f0] sm:$0xff] %vm1809, %v1801
  %1873 = vst.msk [vmem:[%s2 + $0x1f8] sm:$0xff] %vm1809, %v1806
  // Predicated region
  $region10: #{tpu_custom_call.1} parent=0 // pred_check
    _
  $region11: #{tpu_custom_call.1} parent=0 // pred_check_branch
    %1875 = sbr.rel (0) target = $region13
  $region12: #{tpu_custom_call.1} parent=0 // pred_region
    _
  $region13: #{tpu_custom_call.1} parent=0 // pred_fallthru
    _
  // Predicated region
  $region14: #{tpu_custom_call.1} parent=0 // pred_check
    _
  $region15: #{tpu_custom_call.1} parent=0 // pred_check_branch
    %1877 = sbr.rel (0) target = $region17
  $region16: #{tpu_custom_call.1} parent=0 // pred_region
    _
  $region17: #{tpu_custom_call.1} parent=0 // pred_fallthru
    _

</llo_original>
